<compile_context>
chip_gen: v6e
topology: v6e:2x2x1
jax: 0.10.0
libtpu: 0.0.40
codegen_flags: <defaults>
</compile_context>

<pallas_src>
import functools
import math

import jax
import jax.numpy as jnp
from jax import lax
from jax.experimental import pallas as pl
from jax.experimental.pallas import tpu as pltpu


def _msa_kernel(x_ref, wqkv_ref, bqkv_ref, wo_ref, bo_ref, o_ref, *,
                num_heads, head_dim):
    """Fused MSA for one batch element.

    x_ref:    (1, S, E)    input tokens
    wqkv_ref: (E, 3*A)     fused [Wq | Wk | Wv] (already transposed for x @ W)
    bqkv_ref: (1, 3*A)     fused [bq | bk | bv]
    wo_ref:   (A, A)       output projection weight (transposed for x @ W)
    bo_ref:   (1, A)       output projection bias
    o_ref:    (1, S, A)
    """
    A = num_heads * head_dim
    scale = 1.0 / math.sqrt(head_dim)

    x = x_ref[0]                               # (S, E)
    wqkv = wqkv_ref[...]                       # (E, 3A)
    wo = wo_ref[...]                           # (A, A)

    # Fused QKV projection: one MXU pass, f32 accumulation.
    qkv = jnp.dot(x, wqkv, preferred_element_type=jnp.float32) + bqkv_ref[...]
    q = qkv[:, 0 * A:1 * A]                    # (S, A)
    k = qkv[:, 1 * A:2 * A]
    v = qkv[:, 2 * A:3 * A]

    # Per-head attention; output projection accumulated head-by-head:
    #   concat_h(oh) @ Wo == sum_h oh @ Wo[h*D:(h+1)*D, :]
    out = None
    for h in range(num_heads):                 # static unroll (num_heads is small)
        lo = h * head_dim
        hi = lo + head_dim
        qh = q[:, lo:hi]                       # (S, D)
        kh = k[:, lo:hi]
        vh = v[:, lo:hi]

        # scores = qh @ kh^T / sqrt(D)   (contract last dims, no explicit .T)
        s = lax.dot_general(qh, kh, (((1,), (1,)), ((), ())),
                            preferred_element_type=jnp.float32) * scale   # (S, S)
        s = s - jnp.max(s, axis=-1, keepdims=True)
        p = jnp.exp(s)
        p = p / jnp.sum(p, axis=-1, keepdims=True)

        oh = jnp.dot(p, vh, preferred_element_type=jnp.float32)           # (S, D)
        contrib = jnp.dot(oh, wo[lo:hi, :],
                          preferred_element_type=jnp.float32)             # (S, A)
        out = contrib if out is None else out + contrib

    out = out + bo_ref[...]
    o_ref[0] = out.astype(o_ref.dtype)


def msa_forward(x, wq, bq, wk, bk, wv, bv, wo, bo, num_heads):
    """Multi-head self-attention matching PyTorch `_MSA.forward`.

    Args:
      x:  (B, S, E)
      wq/wk/wv: (A, E), bq/bk/bv: (A,)   where A = (E // num_heads) * num_heads
      wo: (A, A), bo: (A,)
    Returns:
      (B, S, A)
    """
    B, S, E = x.shape
    A = wq.shape[0]
    head_dim = A // num_heads

    # --- glue: fuse projection weights/biases (one matmul operand, fewer DMAs) ---
    wqkv = jnp.concatenate([wq.T, wk.T, wv.T], axis=1)           # (E, 3A)
    bqkv = jnp.concatenate([bq, bk, bv]).reshape(1, 3 * A)       # (1, 3A)
    wo_t = wo.T                                                  # (A, A)
    bo_row = bo.reshape(1, A)                                    # (1, A)

    kernel = functools.partial(_msa_kernel, num_heads=num_heads, head_dim=head_dim)

    itemsize = jnp.dtype(x.dtype).itemsize
    flops = (2 * B * S * E * 3 * A                # QKV projection
             + 2 * B * num_heads * S * S * head_dim * 2   # scores + attn@V
             + 2 * B * S * A * A)                 # output projection
    bytes_accessed = (x.size + wqkv.size + bqkv.size + wo_t.size + bo_row.size
                      + B * S * A) * itemsize

    out = pl.pallas_call(
        kernel,
        out_shape=jax.ShapeDtypeStruct((B, S, A), x.dtype),
        grid_spec=pltpu.PrefetchScalarGridSpec(
            num_scalar_prefetch=0,
            grid=(B,),
            in_specs=[
                pl.BlockSpec((1, S, E), lambda b: (b, 0, 0)),    # x (per batch)
                pl.BlockSpec((E, 3 * A), lambda b: (0, 0)),      # fused QKV weight
                pl.BlockSpec((1, 3 * A), lambda b: (0, 0)),      # fused QKV bias
                pl.BlockSpec((A, A), lambda b: (0, 0)),          # out-proj weight
                pl.BlockSpec((1, A), lambda b: (0, 0)),          # out-proj bias
            ],
            out_specs=pl.BlockSpec((1, S, A), lambda b: (b, 0, 0)),
        ),
        compiler_params=pltpu.CompilerParams(
            dimension_semantics=("parallel",),
            vmem_limit_bytes=32 * 1024 * 1024,
        ),
        cost_estimate=pl.CostEstimate(
            flops=flops,
            transcendentals=B * num_heads * S * S,
            bytes_accessed=bytes_accessed,
        ),
    )(x, wqkv, bqkv, wo_t, bo_row)
    return out


def _msa_ref(x, wq, bq, wk, bk, wv, bv, wo, bo, num_heads):
    """Pure-JAX reference mirroring the PyTorch module exactly."""
    B, S, E = x.shape
    A = wq.shape[0]
    D = A // num_heads

    q = x @ wq.T + bq
    k = x @ wk.T + bk
    v = x @ wv.T + bv

    def split(t):
        return t.reshape(B, S, num_heads, D).transpose(0, 2, 1, 3)   # (B, H, S, D)

    qh, kh, vh = split(q), split(k), split(v)
    scores = jnp.einsum("bhsd,bhtd->bhst", qh, kh) / math.sqrt(D)
    p = jax.nn.softmax(scores, axis=-1)
    o = jnp.einsum("bhst,bhtd->bhsd", p, vh)
    o = o.transpose(0, 2, 1, 3).reshape(B, S, A)
    return o @ wo.T + bo


if __name__ == "__main__":
    # Small shapes consistent with the module: batch=2, seq=16, embed=32, heads=4.
    B, S, E, H = 2, 16, 32, 4
    A = (E // H) * H                       # all_heads

    key = jax.random.PRNGKey(0)
    ks = jax.random.split(key, 9)

    def lin_init(kw, kb, out_dim, in_dim):
        bound = 1.0 / math.sqrt(in_dim)
        w = jax.random.uniform(kw, (out_dim, in_dim), minval=-bound, maxval=bound,
                               dtype=jnp.float32)
        b = jax.random.uniform(kb, (out_dim,), minval=-bound, maxval=bound,
                               dtype=jnp.float32)
        return w, b

    x = jax.random.normal(ks[0], (B, S, E), dtype=jnp.float32)
    wq, bq = lin_init(ks[1], ks[2], A, E)
    wk, bk = lin_init(ks[3], ks[4], A, E)
    wv, bv = lin_init(ks[5], ks[6], A, E)
    wo, bo = lin_init(ks[7], ks[8], A, A)

    out = msa_forward(x, wq, bq, wk, bk, wv, bv, wo, bo, H)
    out = jax.block_until_ready(out)

    ref = _msa_ref(x, wq, bq, wk, bk, wv, bv, wo, bo, H)

    assert out.shape == (B, S, A)
    assert jnp.allclose(out, ref, atol=1e-4, rtol=1e-4), (
        float(jnp.max(jnp.abs(out - ref))))
    print("KERNEL_OK")
</pallas_src>

<mosaic_0001>
module attributes {stable_mosaic.version = 11 : i64} {
  func.func @_msa_kernel(%arg0: i32, %arg1: memref<1x16x32xf32, #tpu.memory_space<vmem>>, %arg2: memref<32x96xf32, #tpu.memory_space<vmem>>, %arg3: memref<1x96xf32, #tpu.memory_space<vmem>>, %arg4: memref<32x32xf32, #tpu.memory_space<vmem>>, %arg5: memref<1x32xf32, #tpu.memory_space<vmem>>, %arg6: memref<1x16x32xf32, #tpu.memory_space<vmem>>) attributes {dimension_semantics = [#tpu.dimension_semantics<parallel>], iteration_bounds = array<i64: 2>, scalar_prefetch = 0 : i64, scratch_operands = 0 : i64, tpu.core_type = #tpu.core_type<tc>, window_params = [{transform_indices = @transform_0, window_bounds = array<i64: 1, 16, 32>}, {pipeline_mode = #tpu.pipeline_mode<synchronous>, transform_indices = @transform_1, window_bounds = array<i64: 32, 96>}, {pipeline_mode = #tpu.pipeline_mode<synchronous>, transform_indices = @transform_2, window_bounds = array<i64: 1, 96>}, {pipeline_mode = #tpu.pipeline_mode<synchronous>, transform_indices = @transform_3, window_bounds = array<i64: 32, 32>}, {pipeline_mode = #tpu.pipeline_mode<synchronous>, transform_indices = @transform_4, window_bounds = array<i64: 1, 32>}, {transform_indices = @transform_5, window_bounds = array<i64: 1, 16, 32>}]} {
    %c0 = arith.constant 0 : index
    %c0_0 = arith.constant 0 : index
    %c0_1 = arith.constant 0 : index
    %0 = vector.load %arg1[%c0, %c0_0, %c0_1] : memref<1x16x32xf32, #tpu.memory_space<vmem>>, vector<1x16x32xf32>
    %1 = vector.shape_cast %0 : vector<1x16x32xf32> to vector<16x32xf32>
    %c0_2 = arith.constant 0 : index
    %c0_3 = arith.constant 0 : index
    %2 = vector.load %arg2[%c0_2, %c0_3] : memref<32x96xf32, #tpu.memory_space<vmem>>, vector<32x96xf32>
    %c0_4 = arith.constant 0 : index
    %c0_5 = arith.constant 0 : index
    %3 = vector.load %arg4[%c0_4, %c0_5] : memref<32x32xf32, #tpu.memory_space<vmem>>, vector<32x32xf32>
    %cst = arith.constant dense<0.000000e+00> : vector<16x96xf32>
    %4 = tpu.matmul %1, %2, %cst {dimension_numbers = #tpu.dot_dimension_numbers<[1], [0], [0], [1], [0, 0, 1, 1], [], []>} : vector<16x32xf32>, vector<32x96xf32>, vector<16x96xf32> -> vector<16x96xf32>
    %c0_6 = arith.constant 0 : index
    %c0_7 = arith.constant 0 : index
    %5 = vector.load %arg3[%c0_6, %c0_7] : memref<1x96xf32, #tpu.memory_space<vmem>>, vector<1x96xf32>
    %6 = vector.broadcast %5 : vector<1x96xf32> to vector<16x96xf32>
    %7 = arith.addf %4, %6 : vector<16x96xf32>
    %8 = vector.extract_strided_slice %7 {offsets = [0, 0], sizes = [16, 32], strides = [1, 1]} : vector<16x96xf32> to vector<16x32xf32>
    %9 = vector.extract_strided_slice %7 {offsets = [0, 32], sizes = [16, 32], strides = [1, 1]} : vector<16x96xf32> to vector<16x32xf32>
    %10 = vector.extract_strided_slice %7 {offsets = [0, 64], sizes = [16, 32], strides = [1, 1]} : vector<16x96xf32> to vector<16x32xf32>
    %11 = vector.extract_strided_slice %8 {offsets = [0, 0], sizes = [16, 8], strides = [1, 1]} : vector<16x32xf32> to vector<16x8xf32>
    %12 = vector.extract_strided_slice %9 {offsets = [0, 0], sizes = [16, 8], strides = [1, 1]} : vector<16x32xf32> to vector<16x8xf32>
    %13 = vector.extract_strided_slice %10 {offsets = [0, 0], sizes = [16, 8], strides = [1, 1]} : vector<16x32xf32> to vector<16x8xf32>
    %cst_8 = arith.constant dense<0.000000e+00> : vector<16x16xf32>
    %14 = tpu.matmul %11, %12, %cst_8 {dimension_numbers = #tpu.dot_dimension_numbers<[1], [1], [0], [0], [0, 0, 1, 0], [], []>} : vector<16x8xf32>, vector<16x8xf32>, vector<16x16xf32> -> vector<16x16xf32>
    %cst_9 = arith.constant 0.353553385 : f32
    %15 = vector.broadcast %cst_9 : f32 to vector<16x16xf32>
    %16 = arith.mulf %14, %15 : vector<16x16xf32>
    %cst_10 = arith.constant dense<0xFF800000> : vector<16xf32>
    %17 = vector.multi_reduction <maximumf>, %16, %cst_10 [1] : vector<16x16xf32> to vector<16xf32>
    %18 = vector.shape_cast %17 : vector<16xf32> to vector<16x1xf32>
    %19 = vector.broadcast %18 : vector<16x1xf32> to vector<16x16xf32>
    %20 = arith.subf %16, %19 : vector<16x16xf32>
    %21 = math.exp %20 : vector<16x16xf32>
    %cst_11 = arith.constant dense<0.000000e+00> : vector<16xf32>
    %22 = vector.multi_reduction <add>, %21, %cst_11 [1] : vector<16x16xf32> to vector<16xf32>
    %23 = vector.shape_cast %22 : vector<16xf32> to vector<16x1xf32>
    %24 = vector.broadcast %23 : vector<16x1xf32> to vector<16x16xf32>
    %25 = arith.divf %21, %24 : vector<16x16xf32>
    %cst_12 = arith.constant dense<0.000000e+00> : vector<16x8xf32>
    %26 = tpu.matmul %25, %13, %cst_12 {dimension_numbers = #tpu.dot_dimension_numbers<[1], [0], [0], [1], [0, 0, 1, 1], [], []>} : vector<16x16xf32>, vector<16x8xf32>, vector<16x8xf32> -> vector<16x8xf32>
    %27 = vector.extract_strided_slice %3 {offsets = [0, 0], sizes = [8, 32], strides = [1, 1]} : vector<32x32xf32> to vector<8x32xf32>
    %cst_13 = arith.constant dense<0.000000e+00> : vector<16x32xf32>
    %28 = tpu.matmul %26, %27, %cst_13 {dimension_numbers = #tpu.dot_dimension_numbers<[1], [0], [0], [1], [0, 0, 1, 1], [], []>} : vector<16x8xf32>, vector<8x32xf32>, vector<16x32xf32> -> vector<16x32xf32>
    %29 = vector.extract_strided_slice %8 {offsets = [0, 8], sizes = [16, 8], strides = [1, 1]} : vector<16x32xf32> to vector<16x8xf32>
    %30 = vector.extract_strided_slice %9 {offsets = [0, 8], sizes = [16, 8], strides = [1, 1]} : vector<16x32xf32> to vector<16x8xf32>
    %31 = vector.extract_strided_slice %10 {offsets = [0, 8], sizes = [16, 8], strides = [1, 1]} : vector<16x32xf32> to vector<16x8xf32>
    %cst_14 = arith.constant dense<0.000000e+00> : vector<16x16xf32>
    %32 = tpu.matmul %29, %30, %cst_14 {dimension_numbers = #tpu.dot_dimension_numbers<[1], [1], [0], [0], [0, 0, 1, 0], [], []>} : vector<16x8xf32>, vector<16x8xf32>, vector<16x16xf32> -> vector<16x16xf32>
    %cst_15 = arith.constant 0.353553385 : f32
    %33 = vector.broadcast %cst_15 : f32 to vector<16x16xf32>
    %34 = arith.mulf %32, %33 : vector<16x16xf32>
    %cst_16 = arith.constant dense<0xFF800000> : vector<16xf32>
    %35 = vector.multi_reduction <maximumf>, %34, %cst_16 [1] : vector<16x16xf32> to vector<16xf32>
    %36 = vector.shape_cast %35 : vector<16xf32> to vector<16x1xf32>
    %37 = vector.broadcast %36 : vector<16x1xf32> to vector<16x16xf32>
    %38 = arith.subf %34, %37 : vector<16x16xf32>
    %39 = math.exp %38 : vector<16x16xf32>
    %cst_17 = arith.constant dense<0.000000e+00> : vector<16xf32>
    %40 = vector.multi_reduction <add>, %39, %cst_17 [1] : vector<16x16xf32> to vector<16xf32>
    %41 = vector.shape_cast %40 : vector<16xf32> to vector<16x1xf32>
    %42 = vector.broadcast %41 : vector<16x1xf32> to vector<16x16xf32>
    %43 = arith.divf %39, %42 : vector<16x16xf32>
    %cst_18 = arith.constant dense<0.000000e+00> : vector<16x8xf32>
    %44 = tpu.matmul %43, %31, %cst_18 {dimension_numbers = #tpu.dot_dimension_numbers<[1], [0], [0], [1], [0, 0, 1, 1], [], []>} : vector<16x16xf32>, vector<16x8xf32>, vector<16x8xf32> -> vector<16x8xf32>
    %45 = vector.extract_strided_slice %3 {offsets = [8, 0], sizes = [8, 32], strides = [1, 1]} : vector<32x32xf32> to vector<8x32xf32>
    %cst_19 = arith.constant dense<0.000000e+00> : vector<16x32xf32>
    %46 = tpu.matmul %44, %45, %cst_19 {dimension_numbers = #tpu.dot_dimension_numbers<[1], [0], [0], [1], [0, 0, 1, 1], [], []>} : vector<16x8xf32>, vector<8x32xf32>, vector<16x32xf32> -> vector<16x32xf32>
    %47 = arith.addf %28, %46 : vector<16x32xf32>
    %48 = vector.extract_strided_slice %8 {offsets = [0, 16], sizes = [16, 8], strides = [1, 1]} : vector<16x32xf32> to vector<16x8xf32>
    %49 = vector.extract_strided_slice %9 {offsets = [0, 16], sizes = [16, 8], strides = [1, 1]} : vector<16x32xf32> to vector<16x8xf32>
    %50 = vector.extract_strided_slice %10 {offsets = [0, 16], sizes = [16, 8], strides = [1, 1]} : vector<16x32xf32> to vector<16x8xf32>
    %cst_20 = arith.constant dense<0.000000e+00> : vector<16x16xf32>
    %51 = tpu.matmul %48, %49, %cst_20 {dimension_numbers = #tpu.dot_dimension_numbers<[1], [1], [0], [0], [0, 0, 1, 0], [], []>} : vector<16x8xf32>, vector<16x8xf32>, vector<16x16xf32> -> vector<16x16xf32>
    %cst_21 = arith.constant 0.353553385 : f32
    %52 = vector.broadcast %cst_21 : f32 to vector<16x16xf32>
    %53 = arith.mulf %51, %52 : vector<16x16xf32>
    %cst_22 = arith.constant dense<0xFF800000> : vector<16xf32>
    %54 = vector.multi_reduction <maximumf>, %53, %cst_22 [1] : vector<16x16xf32> to vector<16xf32>
    %55 = vector.shape_cast %54 : vector<16xf32> to vector<16x1xf32>
    %56 = vector.broadcast %55 : vector<16x1xf32> to vector<16x16xf32>
    %57 = arith.subf %53, %56 : vector<16x16xf32>
    %58 = math.exp %57 : vector<16x16xf32>
    %cst_23 = arith.constant dense<0.000000e+00> : vector<16xf32>
    %59 = vector.multi_reduction <add>, %58, %cst_23 [1] : vector<16x16xf32> to vector<16xf32>
    %60 = vector.shape_cast %59 : vector<16xf32> to vector<16x1xf32>
    %61 = vector.broadcast %60 : vector<16x1xf32> to vector<16x16xf32>
    %62 = arith.divf %58, %61 : vector<16x16xf32>
    %cst_24 = arith.constant dense<0.000000e+00> : vector<16x8xf32>
    %63 = tpu.matmul %62, %50, %cst_24 {dimension_numbers = #tpu.dot_dimension_numbers<[1], [0], [0], [1], [0, 0, 1, 1], [], []>} : vector<16x16xf32>, vector<16x8xf32>, vector<16x8xf32> -> vector<16x8xf32>
    %64 = vector.extract_strided_slice %3 {offsets = [16, 0], sizes = [8, 32], strides = [1, 1]} : vector<32x32xf32> to vector<8x32xf32>
    %cst_25 = arith.constant dense<0.000000e+00> : vector<16x32xf32>
    %65 = tpu.matmul %63, %64, %cst_25 {dimension_numbers = #tpu.dot_dimension_numbers<[1], [0], [0], [1], [0, 0, 1, 1], [], []>} : vector<16x8xf32>, vector<8x32xf32>, vector<16x32xf32> -> vector<16x32xf32>
    %66 = arith.addf %47, %65 : vector<16x32xf32>
    %67 = vector.extract_strided_slice %8 {offsets = [0, 24], sizes = [16, 8], strides = [1, 1]} : vector<16x32xf32> to vector<16x8xf32>
    %68 = vector.extract_strided_slice %9 {offsets = [0, 24], sizes = [16, 8], strides = [1, 1]} : vector<16x32xf32> to vector<16x8xf32>
    %69 = vector.extract_strided_slice %10 {offsets = [0, 24], sizes = [16, 8], strides = [1, 1]} : vector<16x32xf32> to vector<16x8xf32>
    %cst_26 = arith.constant dense<0.000000e+00> : vector<16x16xf32>
    %70 = tpu.matmul %67, %68, %cst_26 {dimension_numbers = #tpu.dot_dimension_numbers<[1], [1], [0], [0], [0, 0, 1, 0], [], []>} : vector<16x8xf32>, vector<16x8xf32>, vector<16x16xf32> -> vector<16x16xf32>
    %cst_27 = arith.constant 0.353553385 : f32
    %71 = vector.broadcast %cst_27 : f32 to vector<16x16xf32>
    %72 = arith.mulf %70, %71 : vector<16x16xf32>
    %cst_28 = arith.constant dense<0xFF800000> : vector<16xf32>
    %73 = vector.multi_reduction <maximumf>, %72, %cst_28 [1] : vector<16x16xf32> to vector<16xf32>
    %74 = vector.shape_cast %73 : vector<16xf32> to vector<16x1xf32>
    %75 = vector.broadcast %74 : vector<16x1xf32> to vector<16x16xf32>
    %76 = arith.subf %72, %75 : vector<16x16xf32>
    %77 = math.exp %76 : vector<16x16xf32>
    %cst_29 = arith.constant dense<0.000000e+00> : vector<16xf32>
    %78 = vector.multi_reduction <add>, %77, %cst_29 [1] : vector<16x16xf32> to vector<16xf32>
    %79 = vector.shape_cast %78 : vector<16xf32> to vector<16x1xf32>
    %80 = vector.broadcast %79 : vector<16x1xf32> to vector<16x16xf32>
    %81 = arith.divf %77, %80 : vector<16x16xf32>
    %cst_30 = arith.constant dense<0.000000e+00> : vector<16x8xf32>
    %82 = tpu.matmul %81, %69, %cst_30 {dimension_numbers = #tpu.dot_dimension_numbers<[1], [0], [0], [1], [0, 0, 1, 1], [], []>} : vector<16x16xf32>, vector<16x8xf32>, vector<16x8xf32> -> vector<16x8xf32>
    %83 = vector.extract_strided_slice %3 {offsets = [24, 0], sizes = [8, 32], strides = [1, 1]} : vector<32x32xf32> to vector<8x32xf32>
    %cst_31 = arith.constant dense<0.000000e+00> : vector<16x32xf32>
    %84 = tpu.matmul %82, %83, %cst_31 {dimension_numbers = #tpu.dot_dimension_numbers<[1], [0], [0], [1], [0, 0, 1, 1], [], []>} : vector<16x8xf32>, vector<8x32xf32>, vector<16x32xf32> -> vector<16x32xf32>
    %85 = arith.addf %66, %84 : vector<16x32xf32>
    %c0_32 = arith.constant 0 : index
    %c0_33 = arith.constant 0 : index
    %86 = vector.load %arg5[%c0_32, %c0_33] : memref<1x32xf32, #tpu.memory_space<vmem>>, vector<1x32xf32>
    %87 = vector.broadcast %86 : vector<1x32xf32> to vector<16x32xf32>
    %88 = arith.addf %85, %87 : vector<16x32xf32>
    %c0_34 = arith.constant 0 : index
    %c0_35 = arith.constant 0 : index
    %c0_36 = arith.constant 0 : index
    %89 = vector.load %arg6[%c0_34, %c0_35, %c0_36] : memref<1x16x32xf32, #tpu.memory_space<vmem>>, vector<1x16x32xf32>
    %90 = vector.shape_cast %89 : vector<1x16x32xf32> to vector<16x32xf32>
    %91 = vector.shape_cast %88 : vector<16x32xf32> to vector<1x16x32xf32>
    tpu.vector_store %arg6[%c0_34, %c0_35, %c0_36], %91 {strides = array<i32>} : memref<1x16x32xf32, #tpu.memory_space<vmem>>, vector<1x16x32xf32>,
    return
  }
  func.func @transform_0(%arg0: i32) -> (i32, i32, i32) {
    %c0_i32 = arith.constant 0 : i32
    %c0_i32_0 = arith.constant 0 : i32
    %c0_i32_1 = arith.constant 0 : i32
    return %arg0, %c0_i32, %c0_i32_0 : i32, i32, i32
  }
  func.func @transform_1(%arg0: i32) -> (i32, i32) {
    %c0_i32 = arith.constant 0 : i32
    %c0_i32_0 = arith.constant 0 : i32
    %c0_i32_1 = arith.constant 0 : i32
    return %c0_i32, %c0_i32_0 : i32, i32
  }
  func.func @transform_2(%arg0: i32) -> (i32, i32) {
    %c0_i32 = arith.constant 0 : i32
    %c0_i32_0 = arith.constant 0 : i32
    %c0_i32_1 = arith.constant 0 : i32
    return %c0_i32, %c0_i32_0 : i32, i32
  }
  func.func @transform_3(%arg0: i32) -> (i32, i32) {
    %c0_i32 = arith.constant 0 : i32
    %c0_i32_0 = arith.constant 0 : i32
    %c0_i32_1 = arith.constant 0 : i32
    return %c0_i32, %c0_i32_0 : i32, i32
  }
  func.func @transform_4(%arg0: i32) -> (i32, i32) {
    %c0_i32 = arith.constant 0 : i32
    %c0_i32_0 = arith.constant 0 : i32
    %c0_i32_1 = arith.constant 0 : i32
    return %c0_i32, %c0_i32_0 : i32, i32
  }
  func.func @transform_5(%arg0: i32) -> (i32, i32, i32) {
    %c0_i32 = arith.constant 0 : i32
    %c0_i32_0 = arith.constant 0 : i32
    %c0_i32_1 = arith.constant 0 : i32
    return %arg0, %c0_i32, %c0_i32_0 : i32, i32, i32
  }
}

</mosaic_0001>

<llo_original>
// kernel: tpu_custom_call.1
$region0: #{tpu_custom_call.1}
  #allocation0 [shape = 'u32[]', space=smem, size = 0x4, offset = 0x4, fixed_abs, tag = 'smem constant byte address 0x4 - core index']
  #allocation1 [shape = 'u32[144,128]{1,0:T(1,128)}', space=vmem, size = 0x12000, scoped, tag = 'internal scratch']
  %s0 = inlined_call_operand.hbm [shape: f32[2,16,32], index: 0, kind: input, shape index: {}]
  %s1 = inlined_call_operand.hbm [shape: f32[32,96], index: 1, kind: input, shape index: {}]
  %s2 = inlined_call_operand.vmem [shape: f32[1,96], index: 2, kind: input, shape index: {}]
  %s3 = inlined_call_operand.hbm [shape: f32[32,32], index: 3, kind: input, shape index: {}]
  %s4 = inlined_call_operand.vmem [shape: f32[1,32], index: 4, kind: input, shape index: {}]
  %s5 = inlined_call_operand.hbm [shape: f32[2,16,32], index: 5, kind: output, shape index: {}]
  %s6 = sld [smem:[#allocation0]]
  $region65: #{tpu_custom_call.1} parent=0
    _
  %s8 = ssub.s32 1, %s6
  %s9 = scalar_select 0, %s8, %s6
  $region1: #{tpu_custom_call.1} parent=0
    #allocation2 [shape = 'u8[16384]{0}', space=vmem, size = 0x4000, scoped, tag = 'input window, operand 0']
    #allocation3 [shape = 's32[2]{0}', space=sflag, size = 0x8, scoped, tag = 'scoped memory for tpu_custom_call.1']
    #allocation4 [shape = 's32[2]{0}', space=sflag, size = 0x8, scoped, tag = 'scoped memory for tpu_custom_call.1']
    #allocation5 [shape = 'u8[16384]{0}', space=vmem, size = 0x4000, scoped, tag = 'input window, operand 1, single buffered']
    #allocation6 [shape = 's32[1]{0}', space=sflag, size = 0x4, scoped, tag = 'scoped memory for tpu_custom_call.1']
    #allocation7 [shape = 'u8[16384]{0}', space=vmem, size = 0x4000, scoped, tag = 'input window, operand 3, single buffered']
    #allocation8 [shape = 'u8[16384]{0}', space=vmem, size = 0x4000, scoped, tag = 'output window, operand 0']
    %10 = vsyncpa [#allocation3], 0
    %s11 = scalar_lea.sflag [#allocation3], 1
    %12 = vsyncpa %s11, 0
    %13 = vsyncpa [#allocation6], 0
    %14 = vsyncpa [#allocation4], 0
    %s15 = scalar_lea.sflag [#allocation4], 1
    %16 = vsyncpa %s15, 0
    loop: start=0, step=1, limit=4
    $region2: #{tpu_custom_call.1} parent=1 // loop_pre_header
      _
    $region3: #{tpu_custom_call.1} parent=1 // loop_header
      %s18 = sphi 0, %s22
      %p19 = scmp.ge.s32.totalorder %s18, 4
      %s28 = sphi 0, %s30
      %s31 = sphi 0, %s28
      %s32 = sphi 0, %s31
      %s48 = sphi 0, %s32
      %s52 = sphi 0, %s52
      %s54 = sphi 0, %s52
      %s55 = sphi 0, %s54
      %s69 = sphi 0, %s55
      %s73 = sphi 0, %s73
      %s75 = sphi 0, %s73
      %s76 = sphi 0, %s75
      %s90 = sphi 0, %s76
      %s94 = sphi 0, %s94
      %s96 = sphi 0, %s94
      %s97 = sphi 0, %s96
      %s111 = sphi 0, %s97
      %s115 = sphi 0, %s115
      %s117 = sphi 0, %s115
      %s118 = sphi 0, %s117
      %s132 = sphi 0, %s118
      %s138 = sphi 0, %s140
      %s141 = sphi 0, %s138
      %s142 = sphi 0, %s141
      %s158 = sphi 0, %s142
    $region4: #{tpu_custom_call.1} parent=1 // loop_header_branch
      %21 = sbr.rel (%p19) target = $region8
    $region5: #{tpu_custom_call.1} parent=1 // loop_body
      %s23 = ssub.s32 %s18, 1
      %s24 = ssub.s32 %s18, 2
      %s25 = sadd.s32 %s18, 1
      %s26 = ssub.s32 %s18, %s25
      %p27 = scmp.eq.s32.totalorder %s26, 0
      %s29 = sadd.s32 %s28, 1
      %s30 = scalar_select %p27, %s28, %s29
      %p33 = pneg %p27
      %p34 = scmp.eq.s32.totalorder %s18, 1
      %p35 = por %p33, %p34
      %p36 = scmp.ne.s32.totalorder %s28, %s31
      %p37 = scmp.eq.s32.totalorder %s18, 0
      %p38 = por %p36, %p37
      %p39 = scmp.ne.s32.totalorder %s28, %s31
      %p40 = scmp.eq.s32.totalorder %s23, 1
      %p41 = por %p39, %p40
      %p42 = scmp.ne.s32.totalorder %s31, %s32
      %p43 = scmp.eq.s32.totalorder %s23, 0
      %p44 = por %p42, %p43
      %p45 = scmp.ne.s32.totalorder %s31, %s32
      %p46 = scmp.eq.s32.totalorder %s24, 1
      %p47 = por %p45, %p46
      %p49 = scmp.ne.s32.totalorder %s32, %s48
      %p50 = scmp.eq.s32.totalorder %s24, 0
      %p51 = por %p49, %p50
      %s53 = sadd.s32 %s52, 1
      %p56 = scmp.eq.s32.totalorder %s18, 1
      %p57 = scmp.ne.s32.totalorder %s52, %s54
      %p58 = scmp.eq.s32.totalorder %s18, 0
      %p59 = por %p57, %p58
      %p60 = scmp.ne.s32.totalorder %s52, %s54
      %p61 = scmp.eq.s32.totalorder %s23, 1
      %p62 = por %p60, %p61
      %p63 = scmp.ne.s32.totalorder %s54, %s55
      %p64 = scmp.eq.s32.totalorder %s23, 0
      %p65 = por %p63, %p64
      %p66 = scmp.ne.s32.totalorder %s54, %s55
      %p67 = scmp.eq.s32.totalorder %s24, 1
      %p68 = por %p66, %p67
      %p70 = scmp.ne.s32.totalorder %s55, %s69
      %p71 = scmp.eq.s32.totalorder %s24, 0
      %p72 = por %p70, %p71
      %s74 = sadd.s32 %s73, 1
      %p77 = scmp.eq.s32.totalorder %s18, 1
      %p78 = scmp.ne.s32.totalorder %s73, %s75
      %p79 = scmp.eq.s32.totalorder %s18, 0
      %p80 = por %p78, %p79
      %p81 = scmp.ne.s32.totalorder %s73, %s75
      %p82 = scmp.eq.s32.totalorder %s23, 1
      %p83 = por %p81, %p82
      %p84 = scmp.ne.s32.totalorder %s75, %s76
      %p85 = scmp.eq.s32.totalorder %s23, 0
      %p86 = por %p84, %p85
      %p87 = scmp.ne.s32.totalorder %s75, %s76
      %p88 = scmp.eq.s32.totalorder %s24, 1
      %p89 = por %p87, %p88
      %p91 = scmp.ne.s32.totalorder %s76, %s90
      %p92 = scmp.eq.s32.totalorder %s24, 0
      %p93 = por %p91, %p92
      %s95 = sadd.s32 %s94, 1
      %p98 = scmp.eq.s32.totalorder %s18, 1
      %p99 = scmp.ne.s32.totalorder %s94, %s96
      %p100 = scmp.eq.s32.totalorder %s18, 0
      %p101 = por %p99, %p100
      %p102 = scmp.ne.s32.totalorder %s94, %s96
      %p103 = scmp.eq.s32.totalorder %s23, 1
      %p104 = por %p102, %p103
      %p105 = scmp.ne.s32.totalorder %s96, %s97
      %p106 = scmp.eq.s32.totalorder %s23, 0
      %p107 = por %p105, %p106
      %p108 = scmp.ne.s32.totalorder %s96, %s97
      %p109 = scmp.eq.s32.totalorder %s24, 1
      %p110 = por %p108, %p109
      %p112 = scmp.ne.s32.totalorder %s97, %s111
      %p113 = scmp.eq.s32.totalorder %s24, 0
      %p114 = por %p112, %p113
      %s116 = sadd.s32 %s115, 1
      %p119 = scmp.eq.s32.totalorder %s18, 1
      %p120 = scmp.ne.s32.totalorder %s115, %s117
      %p121 = scmp.eq.s32.totalorder %s18, 0
      %p122 = por %p120, %p121
      %p123 = scmp.ne.s32.totalorder %s115, %s117
      %p124 = scmp.eq.s32.totalorder %s23, 1
      %p125 = por %p123, %p124
      %p126 = scmp.ne.s32.totalorder %s117, %s118
      %p127 = scmp.eq.s32.totalorder %s23, 0
      %p128 = por %p126, %p127
      %p129 = scmp.ne.s32.totalorder %s117, %s118
      %p130 = scmp.eq.s32.totalorder %s24, 1
      %p131 = por %p129, %p130
      %p133 = scmp.ne.s32.totalorder %s118, %s132
      %p134 = scmp.eq.s32.totalorder %s24, 0
      %p135 = por %p133, %p134
      %s136 = ssub.s32 %s18, %s25
      %p137 = scmp.eq.s32.totalorder %s136, 0
      %s139 = sadd.s32 %s138, 1
      %s140 = scalar_select %p137, %s138, %s139
      %p143 = pneg %p137
      %p144 = scmp.eq.s32.totalorder %s18, 1
      %p145 = por %p143, %p144
      %p146 = scmp.ne.s32.totalorder %s138, %s141
      %p147 = scmp.eq.s32.totalorder %s18, 0
      %p148 = por %p146, %p147
      %p149 = scmp.ne.s32.totalorder %s138, %s141
      %p150 = scmp.eq.s32.totalorder %s23, 1
      %p151 = por %p149, %p150
      %p152 = scmp.ne.s32.totalorder %s141, %s142
      %p153 = scmp.eq.s32.totalorder %s23, 0
      %p154 = por %p152, %p153
      %p155 = scmp.ne.s32.totalorder %s141, %s142
      %p156 = scmp.eq.s32.totalorder %s24, 1
      %p157 = por %p155, %p156
      %p159 = scmp.ne.s32.totalorder %s142, %s158
      %p160 = scmp.eq.s32.totalorder %s24, 0
      %p161 = por %p159, %p160
      %p162 = scmp.le.s32.totalorder 1, %s18
      %p163 = scmp.lt.s32.totalorder %s18, 3
      %p164 = pnand %p162, %p163
      %p165 = pneg %p164
      // Predicated region
      $region9: #{tpu_custom_call.1} parent=5 // pred_check
        _
      $region10: #{tpu_custom_call.1} parent=5 // pred_check_branch
        %167 = sbr.rel (%p164) target = $region12
      $region11: #{tpu_custom_call.1} parent=5 // pred_region
        %s168 = ssub.s32 %s18, 1
        // Predicated region
        $region13: #{tpu_custom_call.1} parent=11 // pred_check
          %p169 = pneg %p65
        $region14: #{tpu_custom_call.1} parent=11 // pred_check_branch
          %171 = sbr.rel (%p169) target = $region16
        $region15: #{tpu_custom_call.1} parent=11 // pred_region
          %s173 = ssub.s32 512, 512
          %174 = vsyncadd [#allocation6], %s173
          %s175 = sshll.u32 [#allocation5], 4
          %s176 = int_to_ptr.vmem [resolvable:$true] %s175
          %181 = dma.hbm_to_vmem [thread:$0]  %s1, 512, %s176, [#allocation6], 128, 128, 8
        $region16: #{tpu_custom_call.1} parent=11 // pred_fallthru
          _
        // Predicated region
        $region17: #{tpu_custom_call.1} parent=11 // pred_check
          %p182 = pneg %p86
        $region18: #{tpu_custom_call.1} parent=11 // pred_check_branch
          %184 = sbr.rel (%p182) target = $region20
        $region19: #{tpu_custom_call.1} parent=11 // pred_region
          _
        $region20: #{tpu_custom_call.1} parent=11 // pred_fallthru
          _
        // Predicated region
        $region21: #{tpu_custom_call.1} parent=11 // pred_check
          %p185 = pneg %p107
        $region22: #{tpu_custom_call.1} parent=11 // pred_check_branch
          %187 = sbr.rel (%p185) target = $region24
        $region23: #{tpu_custom_call.1} parent=11 // pred_region
          %s189 = ssub.s32 512, 512
          %190 = vsyncadd [#allocation6], %s189
          %s191 = sshll.u32 [#allocation7], 4
          %s192 = int_to_ptr.vmem [resolvable:$true] %s191
          %197 = dma.hbm_to_vmem [thread:$0]  %s3, 512, %s192, [#allocation6], 128, 128, 8
        $region24: #{tpu_custom_call.1} parent=11 // pred_fallthru
          _
        // Predicated region
        $region25: #{tpu_custom_call.1} parent=11 // pred_check
          %p198 = pneg %p128
        $region26: #{tpu_custom_call.1} parent=11 // pred_check_branch
          %200 = sbr.rel (%p198) target = $region28
        $region27: #{tpu_custom_call.1} parent=11 // pred_region
          _
        $region28: #{tpu_custom_call.1} parent=11 // pred_fallthru
          _
      $region12: #{tpu_custom_call.1} parent=5 // pred_fallthru
        _
      %p201 = scmp.lt.s32.totalorder %s18, 2
      // Predicated region
      $region29: #{tpu_custom_call.1} parent=5 // pred_check
        %p202 = pneg %p201
      $region30: #{tpu_custom_call.1} parent=5 // pred_check_branch
        %204 = sbr.rel (%p202) target = $region32
      $region31: #{tpu_custom_call.1} parent=5 // pred_region
        // Predicated region
        $region33: #{tpu_custom_call.1} parent=31 // pred_check
          %p205 = pneg %p38
        $region34: #{tpu_custom_call.1} parent=31 // pred_check_branch
          %207 = sbr.rel (%p205) target = $region36
        $region35: #{tpu_custom_call.1} parent=31 // pred_region
          %s208 = sand.u32 %s28, 1
          %s209 = scalar_lea.sflag [#allocation3], %s208
          %s210 = sand.u32 %s28, 1
          %s211 = smul.addr %s210, 16
          %s212 = scalar_lea.vmem [#allocation2], %s211
          %s214 = ssub.s32 256, 256
          %215 = vsyncadd %s209, %s214
          %s216 = smul.addr %s18, 2
          %s217 = smul.addr %s216, 128
          %s218 = scalar_lea.hbm %s0, %s217
          %s219 = sshll.u32 %s212, 4
          %s220 = int_to_ptr.vmem [resolvable:$true] %s219
          %225 = dma.hbm_to_vmem [thread:$0]  %s218, 256, %s220, %s209, 128, 128, 8
        $region36: #{tpu_custom_call.1} parent=31 // pred_fallthru
          _
      $region32: #{tpu_custom_call.1} parent=5 // pred_fallthru
        _
      %p226 = scmp.le.s32.totalorder 1, %s18
      %p227 = scmp.lt.s32.totalorder %s18, 3
      %p228 = pnand %p226, %p227
      %p229 = pneg %p228
      // Predicated region
      $region37: #{tpu_custom_call.1} parent=5 // pred_check
        _
      $region38: #{tpu_custom_call.1} parent=5 // pred_check_branch
        %231 = sbr.rel (%p228) target = $region40
      $region39: #{tpu_custom_call.1} parent=5 // pred_region
        %s232 = ssub.s32 %s18, 1
        %s233 = sand.u32 %s31, 1
        %s234 = scalar_lea.sflag [#allocation3], %s233
        %s235 = sand.u32 %s31, 1
        %s236 = smul.addr %s235, 16
        %s237 = scalar_lea.vmem [#allocation2], %s236
        // Predicated region
        $region41: #{tpu_custom_call.1} parent=39 // pred_check
          %p238 = pneg %p44
        $region42: #{tpu_custom_call.1} parent=39 // pred_check_branch
          %240 = sbr.rel (%p238) target = $region44
        $region43: #{tpu_custom_call.1} parent=39 // pred_region
          %241 = dma.done %s234, 256
        $region44: #{tpu_custom_call.1} parent=39 // pred_fallthru
          _
        // Predicated region
        $region45: #{tpu_custom_call.1} parent=39 // pred_check
          %p242 = pneg %p65
        $region46: #{tpu_custom_call.1} parent=39 // pred_check_branch
          %244 = sbr.rel (%p242) target = $region48
        $region47: #{tpu_custom_call.1} parent=39 // pred_region
          %245 = dma.done [#allocation6], 512
        $region48: #{tpu_custom_call.1} parent=39 // pred_fallthru
          _
        // Predicated region
        $region49: #{tpu_custom_call.1} parent=39 // pred_check
          %p246 = pneg %p107
        $region50: #{tpu_custom_call.1} parent=39 // pred_check_branch
          %248 = sbr.rel (%p246) target = $region52
        $region51: #{tpu_custom_call.1} parent=39 // pred_region
          %249 = dma.done [#allocation6], 512
        $region52: #{tpu_custom_call.1} parent=39 // pred_fallthru
          _
        %s250 = sand.u32 %s31, 1
        %s251 = scalar_lea.sflag [#allocation3], %s250
        %s252 = sand.u32 %s31, 1
        %s253 = smul.addr %s252, 16
        %s254 = scalar_lea.vmem [#allocation2], %s253
        %p255 = pneg %p44
        %p256 = pneg %p41
        %p257 = pneg %p65
        %p258 = pneg %p62
        %p259 = pneg %p86
        %p260 = pneg %p83
        %p261 = pneg %p107
        %p262 = pneg %p104
        %p263 = pneg %p128
        %p264 = pneg %p125
        %p265 = pneg %p154
        %p266 = pneg %p151
        %s267 = sand.u32 %s141, 1
        %s268 = scalar_lea.sflag [#allocation4], %s267
        %s269 = sand.u32 %s141, 1
        %s270 = smul.addr %s269, 16
        %s271 = scalar_lea.vmem [#allocation8], %s270
        %v272 = vld [vmem:[%s237] sm:$0xff]
        %v273 = vld [vmem:[%s237 + $0x8] sm:$0xff]
        %v274 = vld [vmem:[#allocation5] sm:$0xff]
        %v275 = vld [vmem:[#allocation5 + $0x8] sm:$0xff]
        %v276 = vld [vmem:[#allocation5 + $0x10] sm:$0xff]
        %v277 = vld [vmem:[#allocation5 + $0x18] sm:$0xff]
        %v278 = vld [vmem:[#allocation7] sm:$0xff]
        %v279 = vld [vmem:[#allocation7 + $0x8] sm:$0xff]
        %v280 = vld [vmem:[#allocation7 + $0x10] sm:$0xff]
        %v281 = vld [vmem:[#allocation7 + $0x18] sm:$0xff]
        %v282 = vld [vmem:[%s2] sm:$0x1]
        %v284 = vlaneseq
        %v285 = vshrl.u32 %v284, 7
        %v286 = vsub.s32 0, %v285
        %v287 = vrot.slane %v282, %v286
        %vm289 = vcmask 261120
        %v291 = vsel %vm289, %v272, 0
        %v294 = vsel %vm289, %v273, 0
        %296 = vmatprep.subr.mxu0 0.0
        %297 = vmatpush1.msra.mxu0 0.0
        %298 = vmatprep.subr.mxu0 0.0
        %299 = vmatpush1.msra.mxu0 0.0
        %300 = vmatprep.subr.mxu0 0.0
        %301 = vmatpush1.msra.mxu0 0.0
        %302 = vmatprep.subr.mxu0 0.0
        %303 = vmatpush1.msra.mxu0 0.0
        %304 = vmatprep.subr.mxu0 0.0
        %305 = vmatpush1.msra.mxu0 0.0
        %306 = vmatprep.subr.mxu0 0.0
        %307 = vmatpush1.msra.mxu0 0.0
        %308 = vmatprep.subr.mxu0 0.0
        %309 = vmatpush1.msra.mxu0 0.0
        %310 = vmatprep.subr.mxu0 0.0
        %311 = vmatpush1.msra.mxu0 0.0
        %312 = vmatprep.subr.mxu0 0.0
        %313 = vmatpush1.msra.mxu0 0.0
        %314 = vmatprep.subr.mxu0 0.0
        %315 = vmatpush1.msra.mxu0 0.0
        %316 = vmatprep.subr.mxu0 0.0
        %317 = vmatpush1.msra.mxu0 0.0
        %318 = vmatprep.subr.mxu0 0.0
        %319 = vmatpush1.msra.mxu0 0.0
        %320 = vmatprep.subr.mxu0 0.0
        %321 = vmatpush1.msra.mxu0 %v277
        %322 = vmatprep.subr.mxu0 0.0
        %323 = vmatpush1.msra.mxu0 %v276
        %324 = vmatprep.subr.mxu0 0.0
        %325 = vmatpush1.msra.mxu0 %v275
        %326 = vmatprep.subr.mxu0 0.0
        %327 = vmatpush1.msra.mxu0 %v274
        %328 = vmatprep.subr.mxu0 0.0
        %329 = vmatpush2.msra.mxu0 0.0
        %330 = vmatprep.subr.mxu0 0.0
        %331 = vmatpush2.msra.mxu0 0.0
        %332 = vmatprep.subr.mxu0 0.0
        %333 = vmatpush2.msra.mxu0 0.0
        %334 = vmatprep.subr.mxu0 0.0
        %335 = vmatpush2.msra.mxu0 0.0
        %336 = vmatprep.subr.mxu0 0.0
        %337 = vmatpush2.msra.mxu0 0.0
        %338 = vmatprep.subr.mxu0 0.0
        %339 = vmatpush2.msra.mxu0 0.0
        %340 = vmatprep.subr.mxu0 0.0
        %341 = vmatpush2.msra.mxu0 0.0
        %342 = vmatprep.subr.mxu0 0.0
        %343 = vmatpush2.msra.mxu0 0.0
        %344 = vmatprep.subr.mxu0 0.0
        %345 = vmatpush2.msra.mxu0 0.0
        %346 = vmatprep.subr.mxu0 0.0
        %347 = vmatpush2.msra.mxu0 0.0
        %348 = vmatprep.subr.mxu0 0.0
        %349 = vmatpush2.msra.mxu0 0.0
        %350 = vmatprep.subr.mxu0 0.0
        %351 = vmatpush2.msra.mxu0 0.0
        %352 = vmatprep.subr.mxu0 0.0
        %353 = vmatpush2.msra.mxu0 0.0
        %354 = vmatprep.subr.mxu0 0.0
        %355 = vmatpush2.msra.mxu0 0.0
        %356 = vmatprep.subr.mxu0 0.0
        %357 = vmatpush2.msra.mxu0 0.0
        %358 = vmatprep.subr.mxu0 0.0
        %359 = vmatpush2.msra.mxu0 0.0
        %360 = vmatprep.mubr.f32.mxu0 0.0
        %361 = vmatmul.mubr.f32.gmra.mxu0 %v291
        %v362 = vpop.f32.mrf.mxu0
        %v363 = vadd.f32 %v287, %v362
        %v364 = vpop.f32.mrf.mxu0
        %365 = vmatprep.mubr.f32.mxu0 0.0
        %366 = vmatmul.mubr.f32.gmra.mxu0 %v294
        %v367 = vpop.f32.mrf.mxu0
        %v368 = vadd.f32 %v287, %v367
        %v369 = vpop.f32.mrf.mxu0
        %370 = vdwg.mxu0
        %373 = vrot.lane.b32.xlu0 %v363, 96
        %v374 = vpop.permute.xlu0 %373
        %375 = vrot.lane.b32.xlu0 %v368, 96
        %v376 = vpop.permute.xlu0 %375
        %vm377 = vcmask 64512
        %v378 = vsel %vm377, %v363, 0
        %v380 = vsel %vm377, %v368, 0
        %v382 = vsel %vm377, %v374, 0
        %v384 = vsel %vm377, %v376, 0
        %386 = vmatprep.subr.mxu0 0.0
        %387 = vmatpush1.xpose.msra.mxu0 0.0
        %388 = vmatprep.subr.mxu0 0.0
        %389 = vmatpush1.xpose.msra.mxu0 0.0
        %390 = vmatprep.subr.mxu0 0.0
        %391 = vmatpush1.xpose.msra.mxu0 0.0
        %392 = vmatprep.subr.mxu0 0.0
        %393 = vmatpush1.xpose.msra.mxu0 0.0
        %394 = vmatprep.subr.mxu0 0.0
        %395 = vmatpush1.xpose.msra.mxu0 0.0
        %396 = vmatprep.subr.mxu0 0.0
        %397 = vmatpush1.xpose.msra.mxu0 0.0
        %398 = vmatprep.subr.mxu0 0.0
        %399 = vmatpush1.xpose.msra.mxu0 0.0
        %400 = vmatprep.subr.mxu0 0.0
        %401 = vmatpush1.xpose.msra.mxu0 0.0
        %402 = vmatprep.subr.mxu0 0.0
        %403 = vmatpush1.xpose.msra.mxu0 0.0
        %404 = vmatprep.subr.mxu0 0.0
        %405 = vmatpush1.xpose.msra.mxu0 0.0
        %406 = vmatprep.subr.mxu0 0.0
        %407 = vmatpush1.xpose.msra.mxu0 0.0
        %408 = vmatprep.subr.mxu0 0.0
        %409 = vmatpush1.xpose.msra.mxu0 0.0
        %410 = vmatprep.subr.mxu0 0.0
        %411 = vmatpush1.xpose.msra.mxu0 0.0
        %412 = vmatprep.subr.mxu0 0.0
        %413 = vmatpush1.xpose.msra.mxu0 0.0
        %414 = vmatprep.subr.mxu0 0.0
        %415 = vmatpush1.xpose.msra.mxu0 %v384
        %416 = vmatprep.subr.mxu0 0.0
        %417 = vmatpush1.xpose.msra.mxu0 %v382
        %418 = vmatprep.subr.mxu0 0.0
        %419 = vmatpush2.xpose.msra.mxu0 0.0
        %420 = vmatprep.subr.mxu0 0.0
        %421 = vmatpush2.xpose.msra.mxu0 0.0
        %422 = vmatprep.subr.mxu0 0.0
        %423 = vmatpush2.xpose.msra.mxu0 0.0
        %424 = vmatprep.subr.mxu0 0.0
        %425 = vmatpush2.xpose.msra.mxu0 0.0
        %426 = vmatprep.subr.mxu0 0.0
        %427 = vmatpush2.xpose.msra.mxu0 0.0
        %428 = vmatprep.subr.mxu0 0.0
        %429 = vmatpush2.xpose.msra.mxu0 0.0
        %430 = vmatprep.subr.mxu0 0.0
        %431 = vmatpush2.xpose.msra.mxu0 0.0
        %432 = vmatprep.subr.mxu0 0.0
        %433 = vmatpush2.xpose.msra.mxu0 0.0
        %434 = vmatprep.subr.mxu0 0.0
        %435 = vmatpush2.xpose.msra.mxu0 0.0
        %436 = vmatprep.subr.mxu0 0.0
        %437 = vmatpush2.xpose.msra.mxu0 0.0
        %438 = vmatprep.subr.mxu0 0.0
        %439 = vmatpush2.xpose.msra.mxu0 0.0
        %440 = vmatprep.subr.mxu0 0.0
        %441 = vmatpush2.xpose.msra.mxu0 0.0
        %442 = vmatprep.subr.mxu0 0.0
        %443 = vmatpush2.xpose.msra.mxu0 0.0
        %444 = vmatprep.subr.mxu0 0.0
        %445 = vmatpush2.xpose.msra.mxu0 0.0
        %446 = vmatprep.subr.mxu0 0.0
        %447 = vmatpush2.xpose.msra.mxu0 0.0
        %448 = vmatprep.subr.mxu0 0.0
        %449 = vmatpush2.xpose.msra.mxu0 0.0
        %450 = vmatprep.mubr.f32.mxu0 0.0
        %451 = vmatmul.mubr.f32.gmra.mxu0 %v378
        %v452 = vpop.f32.mrf.mxu0
        %v453 = vadd.f32 0.0, %v452
        %v454 = vpop.f32.mrf.mxu0
        %455 = vmatprep.mubr.f32.mxu0 0.0
        %456 = vmatmul.mubr.f32.gmra.mxu0 %v380
        %v457 = vpop.f32.mrf.mxu0
        %v458 = vadd.f32 0.0, %v457
        %v459 = vpop.f32.mrf.mxu0
        %460 = vdwg.mxu0
        %v461 = vmul.f32 %v453, 0.35355338
        %v462 = vmul.f32 %v458, 0.35355338
        %vm463 = vcmask 130048
        %v464 = vsel %vm463, %v461, -inf
        %465 = vmax.xlane.f32.xlu0 %v464
        %v466 = vpop.xlane.xlu0 %465
        %v467 = vsel %vm463, %v462, -inf
        %468 = vmax.xlane.f32.xlu0 %v467
        %v469 = vpop.xlane.xlu0 %468
        %v470 = vsub.f32 %v461, %v466
        %v471 = vsub.f32 %v462, %v469
        %v472 = vmul.f32 %v470, 1.442695
        %v473 = vpow.pop %v472
        %v474 = vmul.f32 %v471, 1.442695
        %v475 = vpow.pop %v474
        %v476 = vsel %vm463, %v473, 0.0
        %477 = vadd.xlane.f32.xlu0 %v476
        %v478 = vpop.xlane.xlu0 %477
        %v479 = vsel %vm463, %v475, 0.0
        %480 = vadd.xlane.f32.xlu0 %v479
        %v481 = vpop.xlane.xlu0 %480
        %v482 = vrcp.pop %v478
        %v483 = vmul.f32 %v473, %v482
        %v484 = vrcp.pop %v481
        %v485 = vmul.f32 %v475, %v484
        %486 = vrot.lane.b32.xlu0 %v363, 64
        %v487 = vpop.permute.xlu0 %486
        %488 = vrot.lane.b32.xlu0 %v368, 64
        %v489 = vpop.permute.xlu0 %488
        %v493 = vsel %vm463, %v483, 0
        %v496 = vsel %vm463, %v485, 0
        %498 = vmatprep.subr.mxu0 0.0
        %499 = vmatpush1.msra.mxu0 0.0
        %500 = vmatprep.subr.mxu0 0.0
        %501 = vmatpush1.msra.mxu0 0.0
        %502 = vmatprep.subr.mxu0 0.0
        %503 = vmatpush1.msra.mxu0 0.0
        %504 = vmatprep.subr.mxu0 0.0
        %505 = vmatpush1.msra.mxu0 0.0
        %506 = vmatprep.subr.mxu0 0.0
        %507 = vmatpush1.msra.mxu0 0.0
        %508 = vmatprep.subr.mxu0 0.0
        %509 = vmatpush1.msra.mxu0 0.0
        %510 = vmatprep.subr.mxu0 0.0
        %511 = vmatpush1.msra.mxu0 0.0
        %512 = vmatprep.subr.mxu0 0.0
        %513 = vmatpush1.msra.mxu0 0.0
        %514 = vmatprep.subr.mxu0 0.0
        %515 = vmatpush1.msra.mxu0 0.0
        %516 = vmatprep.subr.mxu0 0.0
        %517 = vmatpush1.msra.mxu0 0.0
        %518 = vmatprep.subr.mxu0 0.0
        %519 = vmatpush1.msra.mxu0 0.0
        %520 = vmatprep.subr.mxu0 0.0
        %521 = vmatpush1.msra.mxu0 0.0
        %522 = vmatprep.subr.mxu0 0.0
        %523 = vmatpush1.msra.mxu0 0.0
        %524 = vmatprep.subr.mxu0 0.0
        %525 = vmatpush1.msra.mxu0 0.0
        %526 = vmatprep.subr.mxu0 0.0
        %527 = vmatpush1.msra.mxu0 %v489
        %528 = vmatprep.subr.mxu0 0.0
        %529 = vmatpush1.msra.mxu0 %v487
        %530 = vmatprep.subr.mxu0 0.0
        %531 = vmatpush2.msra.mxu0 0.0
        %532 = vmatprep.subr.mxu0 0.0
        %533 = vmatpush2.msra.mxu0 0.0
        %534 = vmatprep.subr.mxu0 0.0
        %535 = vmatpush2.msra.mxu0 0.0
        %536 = vmatprep.subr.mxu0 0.0
        %537 = vmatpush2.msra.mxu0 0.0
        %538 = vmatprep.subr.mxu0 0.0
        %539 = vmatpush2.msra.mxu0 0.0
        %540 = vmatprep.subr.mxu0 0.0
        %541 = vmatpush2.msra.mxu0 0.0
        %542 = vmatprep.subr.mxu0 0.0
        %543 = vmatpush2.msra.mxu0 0.0
        %544 = vmatprep.subr.mxu0 0.0
        %545 = vmatpush2.msra.mxu0 0.0
        %546 = vmatprep.subr.mxu0 0.0
        %547 = vmatpush2.msra.mxu0 0.0
        %548 = vmatprep.subr.mxu0 0.0
        %549 = vmatpush2.msra.mxu0 0.0
        %550 = vmatprep.subr.mxu0 0.0
        %551 = vmatpush2.msra.mxu0 0.0
        %552 = vmatprep.subr.mxu0 0.0
        %553 = vmatpush2.msra.mxu0 0.0
        %554 = vmatprep.subr.mxu0 0.0
        %555 = vmatpush2.msra.mxu0 0.0
        %556 = vmatprep.subr.mxu0 0.0
        %557 = vmatpush2.msra.mxu0 0.0
        %558 = vmatprep.subr.mxu0 0.0
        %559 = vmatpush2.msra.mxu0 0.0
        %560 = vmatprep.subr.mxu0 0.0
        %561 = vmatpush2.msra.mxu0 0.0
        %562 = vmatprep.mubr.f32.mxu0 0.0
        %563 = vmatmul.mubr.f32.gmra.mxu0 %v493
        %v564 = vpop.f32.mrf.mxu0
        %v565 = vadd.f32 0.0, %v564
        %v566 = vpop.f32.mrf.mxu0
        %567 = vmatprep.mubr.f32.mxu0 0.0
        %568 = vmatmul.mubr.f32.gmra.mxu0 %v496
        %v569 = vpop.f32.mrf.mxu0
        %v570 = vadd.f32 0.0, %v569
        %v571 = vpop.f32.mrf.mxu0
        %572 = vdwg.mxu0
        %573 = vrot.lane.b32.xlu0 %v363, 120
        %v574 = vpop.permute.xlu0 %573
        %575 = vrot.lane.b32.xlu0 %v368, 120
        %v576 = vpop.permute.xlu0 %575
        %577 = vrot.lane.b32.xlu0 %v363, 88
        %v578 = vpop.permute.xlu0 %577
        %579 = vrot.lane.b32.xlu0 %v368, 88
        %v580 = vpop.permute.xlu0 %579
        %v581 = vsel %vm377, %v574, 0
        %v583 = vsel %vm377, %v576, 0
        %v585 = vsel %vm377, %v578, 0
        %v587 = vsel %vm377, %v580, 0
        %589 = vmatprep.subr.mxu0 0.0
        %590 = vmatpush1.xpose.msra.mxu0 0.0
        %591 = vmatprep.subr.mxu0 0.0
        %592 = vmatpush1.xpose.msra.mxu0 0.0
        %593 = vmatprep.subr.mxu0 0.0
        %594 = vmatpush1.xpose.msra.mxu0 0.0
        %595 = vmatprep.subr.mxu0 0.0
        %596 = vmatpush1.xpose.msra.mxu0 0.0
        %597 = vmatprep.subr.mxu0 0.0
        %598 = vmatpush1.xpose.msra.mxu0 0.0
        %599 = vmatprep.subr.mxu0 0.0
        %600 = vmatpush1.xpose.msra.mxu0 0.0
        %601 = vmatprep.subr.mxu0 0.0
        %602 = vmatpush1.xpose.msra.mxu0 0.0
        %603 = vmatprep.subr.mxu0 0.0
        %604 = vmatpush1.xpose.msra.mxu0 0.0
        %605 = vmatprep.subr.mxu0 0.0
        %606 = vmatpush1.xpose.msra.mxu0 0.0
        %607 = vmatprep.subr.mxu0 0.0
        %608 = vmatpush1.xpose.msra.mxu0 0.0
        %609 = vmatprep.subr.mxu0 0.0
        %610 = vmatpush1.xpose.msra.mxu0 0.0
        %611 = vmatprep.subr.mxu0 0.0
        %612 = vmatpush1.xpose.msra.mxu0 0.0
        %613 = vmatprep.subr.mxu0 0.0
        %614 = vmatpush1.xpose.msra.mxu0 0.0
        %615 = vmatprep.subr.mxu0 0.0
        %616 = vmatpush1.xpose.msra.mxu0 0.0
        %617 = vmatprep.subr.mxu0 0.0
        %618 = vmatpush1.xpose.msra.mxu0 %v587
        %619 = vmatprep.subr.mxu0 0.0
        %620 = vmatpush1.xpose.msra.mxu0 %v585
        %621 = vmatprep.subr.mxu0 0.0
        %622 = vmatpush2.xpose.msra.mxu0 0.0
        %623 = vmatprep.subr.mxu0 0.0
        %624 = vmatpush2.xpose.msra.mxu0 0.0
        %625 = vmatprep.subr.mxu0 0.0
        %626 = vmatpush2.xpose.msra.mxu0 0.0
        %627 = vmatprep.subr.mxu0 0.0
        %628 = vmatpush2.xpose.msra.mxu0 0.0
        %629 = vmatprep.subr.mxu0 0.0
        %630 = vmatpush2.xpose.msra.mxu0 0.0
        %631 = vmatprep.subr.mxu0 0.0
        %632 = vmatpush2.xpose.msra.mxu0 0.0
        %633 = vmatprep.subr.mxu0 0.0
        %634 = vmatpush2.xpose.msra.mxu0 0.0
        %635 = vmatprep.subr.mxu0 0.0
        %636 = vmatpush2.xpose.msra.mxu0 0.0
        %637 = vmatprep.subr.mxu0 0.0
        %638 = vmatpush2.xpose.msra.mxu0 0.0
        %639 = vmatprep.subr.mxu0 0.0
        %640 = vmatpush2.xpose.msra.mxu0 0.0
        %641 = vmatprep.subr.mxu0 0.0
        %642 = vmatpush2.xpose.msra.mxu0 0.0
        %643 = vmatprep.subr.mxu0 0.0
        %644 = vmatpush2.xpose.msra.mxu0 0.0
        %645 = vmatprep.subr.mxu0 0.0
        %646 = vmatpush2.xpose.msra.mxu0 0.0
        %647 = vmatprep.subr.mxu0 0.0
        %648 = vmatpush2.xpose.msra.mxu0 0.0
        %649 = vmatprep.subr.mxu0 0.0
        %650 = vmatpush2.xpose.msra.mxu0 0.0
        %651 = vmatprep.subr.mxu0 0.0
        %652 = vmatpush2.xpose.msra.mxu0 0.0
        %653 = vmatprep.mubr.f32.mxu0 0.0
        %654 = vmatmul.mubr.f32.gmra.mxu0 %v581
        %v655 = vpop.f32.mrf.mxu0
        %v656 = vadd.f32 0.0, %v655
        %v657 = vpop.f32.mrf.mxu0
        %658 = vmatprep.mubr.f32.mxu0 0.0
        %659 = vmatmul.mubr.f32.gmra.mxu0 %v583
        %v660 = vpop.f32.mrf.mxu0
        %v661 = vadd.f32 0.0, %v660
        %v662 = vpop.f32.mrf.mxu0
        %663 = vdwg.mxu0
        %v664 = vmul.f32 %v656, 0.35355338
        %v665 = vmul.f32 %v661, 0.35355338
        %v666 = vsel %vm463, %v664, -inf
        %667 = vmax.xlane.f32.xlu0 %v666
        %v668 = vpop.xlane.xlu0 %667
        %v669 = vsel %vm463, %v665, -inf
        %670 = vmax.xlane.f32.xlu0 %v669
        %v671 = vpop.xlane.xlu0 %670
        %v672 = vsub.f32 %v664, %v668
        %v673 = vsub.f32 %v665, %v671
        %v674 = vmul.f32 %v672, 1.442695
        %v675 = vpow.pop %v674
        %v676 = vmul.f32 %v673, 1.442695
        %v677 = vpow.pop %v676
        %v678 = vsel %vm463, %v675, 0.0
        %679 = vadd.xlane.f32.xlu0 %v678
        %v680 = vpop.xlane.xlu0 %679
        %v681 = vsel %vm463, %v677, 0.0
        %682 = vadd.xlane.f32.xlu0 %v681
        %v683 = vpop.xlane.xlu0 %682
        %v684 = vrcp.pop %v680
        %v685 = vmul.f32 %v675, %v684
        %v686 = vrcp.pop %v683
        %v687 = vmul.f32 %v677, %v686
        %688 = vrot.lane.b32.xlu0 %v363, 56
        %v689 = vpop.permute.xlu0 %688
        %690 = vrot.lane.b32.xlu0 %v368, 56
        %v691 = vpop.permute.xlu0 %690
        %v695 = vsel %vm463, %v685, 0
        %v698 = vsel %vm463, %v687, 0
        %700 = vmatprep.subr.mxu0 0.0
        %701 = vmatpush1.msra.mxu0 0.0
        %702 = vmatprep.subr.mxu0 0.0
        %703 = vmatpush1.msra.mxu0 0.0
        %704 = vmatprep.subr.mxu0 0.0
        %705 = vmatpush1.msra.mxu0 0.0
        %706 = vmatprep.subr.mxu0 0.0
        %707 = vmatpush1.msra.mxu0 0.0
        %708 = vmatprep.subr.mxu0 0.0
        %709 = vmatpush1.msra.mxu0 0.0
        %710 = vmatprep.subr.mxu0 0.0
        %711 = vmatpush1.msra.mxu0 0.0
        %712 = vmatprep.subr.mxu0 0.0
        %713 = vmatpush1.msra.mxu0 0.0
        %714 = vmatprep.subr.mxu0 0.0
        %715 = vmatpush1.msra.mxu0 0.0
        %716 = vmatprep.subr.mxu0 0.0
        %717 = vmatpush1.msra.mxu0 0.0
        %718 = vmatprep.subr.mxu0 0.0
        %719 = vmatpush1.msra.mxu0 0.0
        %720 = vmatprep.subr.mxu0 0.0
        %721 = vmatpush1.msra.mxu0 0.0
        %722 = vmatprep.subr.mxu0 0.0
        %723 = vmatpush1.msra.mxu0 0.0
        %724 = vmatprep.subr.mxu0 0.0
        %725 = vmatpush1.msra.mxu0 0.0
        %726 = vmatprep.subr.mxu0 0.0
        %727 = vmatpush1.msra.mxu0 0.0
        %728 = vmatprep.subr.mxu0 0.0
        %729 = vmatpush1.msra.mxu0 %v691
        %730 = vmatprep.subr.mxu0 0.0
        %731 = vmatpush1.msra.mxu0 %v689
        %732 = vmatprep.subr.mxu0 0.0
        %733 = vmatpush2.msra.mxu0 0.0
        %734 = vmatprep.subr.mxu0 0.0
        %735 = vmatpush2.msra.mxu0 0.0
        %736 = vmatprep.subr.mxu0 0.0
        %737 = vmatpush2.msra.mxu0 0.0
        %738 = vmatprep.subr.mxu0 0.0
        %739 = vmatpush2.msra.mxu0 0.0
        %740 = vmatprep.subr.mxu0 0.0
        %741 = vmatpush2.msra.mxu0 0.0
        %742 = vmatprep.subr.mxu0 0.0
        %743 = vmatpush2.msra.mxu0 0.0
        %744 = vmatprep.subr.mxu0 0.0
        %745 = vmatpush2.msra.mxu0 0.0
        %746 = vmatprep.subr.mxu0 0.0
        %747 = vmatpush2.msra.mxu0 0.0
        %748 = vmatprep.subr.mxu0 0.0
        %749 = vmatpush2.msra.mxu0 0.0
        %750 = vmatprep.subr.mxu0 0.0
        %751 = vmatpush2.msra.mxu0 0.0
        %752 = vmatprep.subr.mxu0 0.0
        %753 = vmatpush2.msra.mxu0 0.0
        %754 = vmatprep.subr.mxu0 0.0
        %755 = vmatpush2.msra.mxu0 0.0
        %756 = vmatprep.subr.mxu0 0.0
        %757 = vmatpush2.msra.mxu0 0.0
        %758 = vmatprep.subr.mxu0 0.0
        %759 = vmatpush2.msra.mxu0 0.0
        %760 = vmatprep.subr.mxu0 0.0
        %761 = vmatpush2.msra.mxu0 0.0
        %762 = vmatprep.subr.mxu0 0.0
        %763 = vmatpush2.msra.mxu0 0.0
        %764 = vmatprep.mubr.f32.mxu0 0.0
        %765 = vmatmul.mubr.f32.gmra.mxu0 %v695
        %v766 = vpop.f32.mrf.mxu0
        %v767 = vadd.f32 0.0, %v766
        %v768 = vpop.f32.mrf.mxu0
        %769 = vmatprep.mubr.f32.mxu0 0.0
        %770 = vmatmul.mubr.f32.gmra.mxu0 %v698
        %v771 = vpop.f32.mrf.mxu0
        %v772 = vadd.f32 0.0, %v771
        %v773 = vpop.f32.mrf.mxu0
        %774 = vdwg.mxu0
        %v776 = vsel %vm377, %v767, 0
        %v779 = vsel %vm377, %v772, 0
        %781 = vmatprep.subr.mxu0 0.0
        %782 = vmatpush1.msra.mxu0 0.0
        %783 = vmatprep.subr.mxu0 0.0
        %784 = vmatpush1.msra.mxu0 0.0
        %785 = vmatprep.subr.mxu0 0.0
        %786 = vmatpush1.msra.mxu0 0.0
        %787 = vmatprep.subr.mxu0 0.0
        %788 = vmatpush1.msra.mxu0 0.0
        %789 = vmatprep.subr.mxu0 0.0
        %790 = vmatpush1.msra.mxu0 0.0
        %791 = vmatprep.subr.mxu0 0.0
        %792 = vmatpush1.msra.mxu0 0.0
        %793 = vmatprep.subr.mxu0 0.0
        %794 = vmatpush1.msra.mxu0 0.0
        %795 = vmatprep.subr.mxu0 0.0
        %796 = vmatpush1.msra.mxu0 0.0
        %797 = vmatprep.subr.mxu0 0.0
        %798 = vmatpush1.msra.mxu0 0.0
        %799 = vmatprep.subr.mxu0 0.0
        %800 = vmatpush1.msra.mxu0 0.0
        %801 = vmatprep.subr.mxu0 0.0
        %802 = vmatpush1.msra.mxu0 0.0
        %803 = vmatprep.subr.mxu0 0.0
        %804 = vmatpush1.msra.mxu0 0.0
        %805 = vmatprep.subr.mxu0 0.0
        %806 = vmatpush1.msra.mxu0 0.0
        %807 = vmatprep.subr.mxu0 0.0
        %808 = vmatpush1.msra.mxu0 0.0
        %809 = vmatprep.subr.mxu0 0.0
        %810 = vmatpush1.msra.mxu0 0.0
        %811 = vmatprep.subr.mxu0 0.0
        %812 = vmatpush1.msra.mxu0 %v279
        %813 = vmatprep.subr.mxu0 0.0
        %814 = vmatpush2.msra.mxu0 0.0
        %815 = vmatprep.subr.mxu0 0.0
        %816 = vmatpush2.msra.mxu0 0.0
        %817 = vmatprep.subr.mxu0 0.0
        %818 = vmatpush2.msra.mxu0 0.0
        %819 = vmatprep.subr.mxu0 0.0
        %820 = vmatpush2.msra.mxu0 0.0
        %821 = vmatprep.subr.mxu0 0.0
        %822 = vmatpush2.msra.mxu0 0.0
        %823 = vmatprep.subr.mxu0 0.0
        %824 = vmatpush2.msra.mxu0 0.0
        %825 = vmatprep.subr.mxu0 0.0
        %826 = vmatpush2.msra.mxu0 0.0
        %827 = vmatprep.subr.mxu0 0.0
        %828 = vmatpush2.msra.mxu0 0.0
        %829 = vmatprep.subr.mxu0 0.0
        %830 = vmatpush2.msra.mxu0 0.0
        %831 = vmatprep.subr.mxu0 0.0
        %832 = vmatpush2.msra.mxu0 0.0
        %833 = vmatprep.subr.mxu0 0.0
        %834 = vmatpush2.msra.mxu0 0.0
        %835 = vmatprep.subr.mxu0 0.0
        %836 = vmatpush2.msra.mxu0 0.0
        %837 = vmatprep.subr.mxu0 0.0
        %838 = vmatpush2.msra.mxu0 0.0
        %839 = vmatprep.subr.mxu0 0.0
        %840 = vmatpush2.msra.mxu0 0.0
        %841 = vmatprep.subr.mxu0 0.0
        %842 = vmatpush2.msra.mxu0 0.0
        %843 = vmatprep.subr.mxu0 0.0
        %844 = vmatpush2.msra.mxu0 0.0
        %845 = vmatprep.mubr.f32.mxu0 0.0
        %846 = vmatmul.mubr.f32.gmra.mxu0 %v776
        %v847 = vpop.f32.mrf.mxu0
        %v848 = vadd.f32 0.0, %v847
        %v849 = vpop.f32.mrf.mxu0
        %850 = vmatprep.mubr.f32.mxu0 0.0
        %851 = vmatmul.mubr.f32.gmra.mxu0 %v779
        %v852 = vpop.f32.mrf.mxu0
        %v853 = vadd.f32 0.0, %v852
        %v854 = vpop.f32.mrf.mxu0
        %855 = vdwg.mxu0
        %v857 = vsel %vm377, %v565, 0
        %v860 = vsel %vm377, %v570, 0
        %862 = vmatprep.subr.mxu0 0.0
        %863 = vmatpush1.msra.mxu0 0.0
        %864 = vmatprep.subr.mxu0 0.0
        %865 = vmatpush1.msra.mxu0 0.0
        %866 = vmatprep.subr.mxu0 0.0
        %867 = vmatpush1.msra.mxu0 0.0
        %868 = vmatprep.subr.mxu0 0.0
        %869 = vmatpush1.msra.mxu0 0.0
        %870 = vmatprep.subr.mxu0 0.0
        %871 = vmatpush1.msra.mxu0 0.0
        %872 = vmatprep.subr.mxu0 0.0
        %873 = vmatpush1.msra.mxu0 0.0
        %874 = vmatprep.subr.mxu0 0.0
        %875 = vmatpush1.msra.mxu0 0.0
        %876 = vmatprep.subr.mxu0 0.0
        %877 = vmatpush1.msra.mxu0 0.0
        %878 = vmatprep.subr.mxu0 0.0
        %879 = vmatpush1.msra.mxu0 0.0
        %880 = vmatprep.subr.mxu0 0.0
        %881 = vmatpush1.msra.mxu0 0.0
        %882 = vmatprep.subr.mxu0 0.0
        %883 = vmatpush1.msra.mxu0 0.0
        %884 = vmatprep.subr.mxu0 0.0
        %885 = vmatpush1.msra.mxu0 0.0
        %886 = vmatprep.subr.mxu0 0.0
        %887 = vmatpush1.msra.mxu0 0.0
        %888 = vmatprep.subr.mxu0 0.0
        %889 = vmatpush1.msra.mxu0 0.0
        %890 = vmatprep.subr.mxu0 0.0
        %891 = vmatpush1.msra.mxu0 0.0
        %892 = vmatprep.subr.mxu0 0.0
        %893 = vmatpush1.msra.mxu0 %v278
        %894 = vmatprep.subr.mxu0 0.0
        %895 = vmatpush2.msra.mxu0 0.0
        %896 = vmatprep.subr.mxu0 0.0
        %897 = vmatpush2.msra.mxu0 0.0
        %898 = vmatprep.subr.mxu0 0.0
        %899 = vmatpush2.msra.mxu0 0.0
        %900 = vmatprep.subr.mxu0 0.0
        %901 = vmatpush2.msra.mxu0 0.0
        %902 = vmatprep.subr.mxu0 0.0
        %903 = vmatpush2.msra.mxu0 0.0
        %904 = vmatprep.subr.mxu0 0.0
        %905 = vmatpush2.msra.mxu0 0.0
        %906 = vmatprep.subr.mxu0 0.0
        %907 = vmatpush2.msra.mxu0 0.0
        %908 = vmatprep.subr.mxu0 0.0
        %909 = vmatpush2.msra.mxu0 0.0
        %910 = vmatprep.subr.mxu0 0.0
        %911 = vmatpush2.msra.mxu0 0.0
        %912 = vmatprep.subr.mxu0 0.0
        %913 = vmatpush2.msra.mxu0 0.0
        %914 = vmatprep.subr.mxu0 0.0
        %915 = vmatpush2.msra.mxu0 0.0
        %916 = vmatprep.subr.mxu0 0.0
        %917 = vmatpush2.msra.mxu0 0.0
        %918 = vmatprep.subr.mxu0 0.0
        %919 = vmatpush2.msra.mxu0 0.0
        %920 = vmatprep.subr.mxu0 0.0
        %921 = vmatpush2.msra.mxu0 0.0
        %922 = vmatprep.subr.mxu0 0.0
        %923 = vmatpush2.msra.mxu0 0.0
        %924 = vmatprep.subr.mxu0 0.0
        %925 = vmatpush2.msra.mxu0 0.0
        %926 = vmatprep.mubr.f32.mxu0 0.0
        %927 = vmatmul.mubr.f32.gmra.mxu0 %v857
        %v928 = vpop.f32.mrf.mxu0
        %v929 = vadd.f32 %v848, %v928
        %v930 = vpop.f32.mrf.mxu0
        %931 = vmatprep.mubr.f32.mxu0 0.0
        %932 = vmatmul.mubr.f32.gmra.mxu0 %v860
        %v933 = vpop.f32.mrf.mxu0
        %v934 = vadd.f32 %v853, %v933
        %v935 = vpop.f32.mrf.mxu0
        %936 = vdwg.mxu0
        %937 = vrot.lane.b32.xlu0 %v363, 112
        %v938 = vpop.permute.xlu0 %937
        %939 = vrot.lane.b32.xlu0 %v368, 112
        %v940 = vpop.permute.xlu0 %939
        %941 = vrot.lane.b32.xlu0 %v363, 80
        %v942 = vpop.permute.xlu0 %941
        %943 = vrot.lane.b32.xlu0 %v368, 80
        %v944 = vpop.permute.xlu0 %943
        %v945 = vsel %vm377, %v938, 0
        %v947 = vsel %vm377, %v940, 0
        %v949 = vsel %vm377, %v942, 0
        %v951 = vsel %vm377, %v944, 0
        %953 = vmatprep.subr.mxu0 0.0
        %954 = vmatpush1.xpose.msra.mxu0 0.0
        %955 = vmatprep.subr.mxu0 0.0
        %956 = vmatpush1.xpose.msra.mxu0 0.0
        %957 = vmatprep.subr.mxu0 0.0
        %958 = vmatpush1.xpose.msra.mxu0 0.0
        %959 = vmatprep.subr.mxu0 0.0
        %960 = vmatpush1.xpose.msra.mxu0 0.0
        %961 = vmatprep.subr.mxu0 0.0
        %962 = vmatpush1.xpose.msra.mxu0 0.0
        %963 = vmatprep.subr.mxu0 0.0
        %964 = vmatpush1.xpose.msra.mxu0 0.0
        %965 = vmatprep.subr.mxu0 0.0
        %966 = vmatpush1.xpose.msra.mxu0 0.0
        %967 = vmatprep.subr.mxu0 0.0
        %968 = vmatpush1.xpose.msra.mxu0 0.0
        %969 = vmatprep.subr.mxu0 0.0
        %970 = vmatpush1.xpose.msra.mxu0 0.0
        %971 = vmatprep.subr.mxu0 0.0
        %972 = vmatpush1.xpose.msra.mxu0 0.0
        %973 = vmatprep.subr.mxu0 0.0
        %974 = vmatpush1.xpose.msra.mxu0 0.0
        %975 = vmatprep.subr.mxu0 0.0
        %976 = vmatpush1.xpose.msra.mxu0 0.0
        %977 = vmatprep.subr.mxu0 0.0
        %978 = vmatpush1.xpose.msra.mxu0 0.0
        %979 = vmatprep.subr.mxu0 0.0
        %980 = vmatpush1.xpose.msra.mxu0 0.0
        %981 = vmatprep.subr.mxu0 0.0
        %982 = vmatpush1.xpose.msra.mxu0 %v951
        %983 = vmatprep.subr.mxu0 0.0
        %984 = vmatpush1.xpose.msra.mxu0 %v949
        %985 = vmatprep.subr.mxu0 0.0
        %986 = vmatpush2.xpose.msra.mxu0 0.0
        %987 = vmatprep.subr.mxu0 0.0
        %988 = vmatpush2.xpose.msra.mxu0 0.0
        %989 = vmatprep.subr.mxu0 0.0
        %990 = vmatpush2.xpose.msra.mxu0 0.0
        %991 = vmatprep.subr.mxu0 0.0
        %992 = vmatpush2.xpose.msra.mxu0 0.0
        %993 = vmatprep.subr.mxu0 0.0
        %994 = vmatpush2.xpose.msra.mxu0 0.0
        %995 = vmatprep.subr.mxu0 0.0
        %996 = vmatpush2.xpose.msra.mxu0 0.0
        %997 = vmatprep.subr.mxu0 0.0
        %998 = vmatpush2.xpose.msra.mxu0 0.0
        %999 = vmatprep.subr.mxu0 0.0
        %1000 = vmatpush2.xpose.msra.mxu0 0.0
        %1001 = vmatprep.subr.mxu0 0.0
        %1002 = vmatpush2.xpose.msra.mxu0 0.0
        %1003 = vmatprep.subr.mxu0 0.0
        %1004 = vmatpush2.xpose.msra.mxu0 0.0
        %1005 = vmatprep.subr.mxu0 0.0
        %1006 = vmatpush2.xpose.msra.mxu0 0.0
        %1007 = vmatprep.subr.mxu0 0.0
        %1008 = vmatpush2.xpose.msra.mxu0 0.0
        %1009 = vmatprep.subr.mxu0 0.0
        %1010 = vmatpush2.xpose.msra.mxu0 0.0
        %1011 = vmatprep.subr.mxu0 0.0
        %1012 = vmatpush2.xpose.msra.mxu0 0.0
        %1013 = vmatprep.subr.mxu0 0.0
        %1014 = vmatpush2.xpose.msra.mxu0 0.0
        %1015 = vmatprep.subr.mxu0 0.0
        %1016 = vmatpush2.xpose.msra.mxu0 0.0
        %1017 = vmatprep.mubr.f32.mxu0 0.0
        %1018 = vmatmul.mubr.f32.gmra.mxu0 %v945
        %v1019 = vpop.f32.mrf.mxu0
        %v1020 = vadd.f32 0.0, %v1019
        %v1021 = vpop.f32.mrf.mxu0
        %1022 = vmatprep.mubr.f32.mxu0 0.0
        %1023 = vmatmul.mubr.f32.gmra.mxu0 %v947
        %v1024 = vpop.f32.mrf.mxu0
        %v1025 = vadd.f32 0.0, %v1024
        %v1026 = vpop.f32.mrf.mxu0
        %1027 = vdwg.mxu0
        %v1028 = vmul.f32 %v1020, 0.35355338
        %v1029 = vmul.f32 %v1025, 0.35355338
        %v1030 = vsel %vm463, %v1028, -inf
        %1031 = vmax.xlane.f32.xlu0 %v1030
        %v1032 = vpop.xlane.xlu0 %1031
        %v1033 = vsel %vm463, %v1029, -inf
        %1034 = vmax.xlane.f32.xlu0 %v1033
        %v1035 = vpop.xlane.xlu0 %1034
        %v1036 = vsub.f32 %v1028, %v1032
        %v1037 = vsub.f32 %v1029, %v1035
        %v1038 = vmul.f32 %v1036, 1.442695
        %v1039 = vpow.pop %v1038
        %v1040 = vmul.f32 %v1037, 1.442695
        %v1041 = vpow.pop %v1040
        %v1042 = vsel %vm463, %v1039, 0.0
        %1043 = vadd.xlane.f32.xlu0 %v1042
        %v1044 = vpop.xlane.xlu0 %1043
        %v1045 = vsel %vm463, %v1041, 0.0
        %1046 = vadd.xlane.f32.xlu0 %v1045
        %v1047 = vpop.xlane.xlu0 %1046
        %v1048 = vrcp.pop %v1044
        %v1049 = vmul.f32 %v1039, %v1048
        %v1050 = vrcp.pop %v1047
        %v1051 = vmul.f32 %v1041, %v1050
        %1052 = vrot.lane.b32.xlu0 %v363, 48
        %v1053 = vpop.permute.xlu0 %1052
        %1054 = vrot.lane.b32.xlu0 %v368, 48
        %v1055 = vpop.permute.xlu0 %1054
        %v1059 = vsel %vm463, %v1049, 0
        %v1062 = vsel %vm463, %v1051, 0
        %1064 = vmatprep.subr.mxu0 0.0
        %1065 = vmatpush1.msra.mxu0 0.0
        %1066 = vmatprep.subr.mxu0 0.0
        %1067 = vmatpush1.msra.mxu0 0.0
        %1068 = vmatprep.subr.mxu0 0.0
        %1069 = vmatpush1.msra.mxu0 0.0
        %1070 = vmatprep.subr.mxu0 0.0
        %1071 = vmatpush1.msra.mxu0 0.0
        %1072 = vmatprep.subr.mxu0 0.0
        %1073 = vmatpush1.msra.mxu0 0.0
        %1074 = vmatprep.subr.mxu0 0.0
        %1075 = vmatpush1.msra.mxu0 0.0
        %1076 = vmatprep.subr.mxu0 0.0
        %1077 = vmatpush1.msra.mxu0 0.0
        %1078 = vmatprep.subr.mxu0 0.0
        %1079 = vmatpush1.msra.mxu0 0.0
        %1080 = vmatprep.subr.mxu0 0.0
        %1081 = vmatpush1.msra.mxu0 0.0
        %1082 = vmatprep.subr.mxu0 0.0
        %1083 = vmatpush1.msra.mxu0 0.0
        %1084 = vmatprep.subr.mxu0 0.0
        %1085 = vmatpush1.msra.mxu0 0.0
        %1086 = vmatprep.subr.mxu0 0.0
        %1087 = vmatpush1.msra.mxu0 0.0
        %1088 = vmatprep.subr.mxu0 0.0
        %1089 = vmatpush1.msra.mxu0 0.0
        %1090 = vmatprep.subr.mxu0 0.0
        %1091 = vmatpush1.msra.mxu0 0.0
        %1092 = vmatprep.subr.mxu0 0.0
        %1093 = vmatpush1.msra.mxu0 %v1055
        %1094 = vmatprep.subr.mxu0 0.0
        %1095 = vmatpush1.msra.mxu0 %v1053
        %1096 = vmatprep.subr.mxu0 0.0
        %1097 = vmatpush2.msra.mxu0 0.0
        %1098 = vmatprep.subr.mxu0 0.0
        %1099 = vmatpush2.msra.mxu0 0.0
        %1100 = vmatprep.subr.mxu0 0.0
        %1101 = vmatpush2.msra.mxu0 0.0
        %1102 = vmatprep.subr.mxu0 0.0
        %1103 = vmatpush2.msra.mxu0 0.0
        %1104 = vmatprep.subr.mxu0 0.0
        %1105 = vmatpush2.msra.mxu0 0.0
        %1106 = vmatprep.subr.mxu0 0.0
        %1107 = vmatpush2.msra.mxu0 0.0
        %1108 = vmatprep.subr.mxu0 0.0
        %1109 = vmatpush2.msra.mxu0 0.0
        %1110 = vmatprep.subr.mxu0 0.0
        %1111 = vmatpush2.msra.mxu0 0.0
        %1112 = vmatprep.subr.mxu0 0.0
        %1113 = vmatpush2.msra.mxu0 0.0
        %1114 = vmatprep.subr.mxu0 0.0
        %1115 = vmatpush2.msra.mxu0 0.0
        %1116 = vmatprep.subr.mxu0 0.0
        %1117 = vmatpush2.msra.mxu0 0.0
        %1118 = vmatprep.subr.mxu0 0.0
        %1119 = vmatpush2.msra.mxu0 0.0
        %1120 = vmatprep.subr.mxu0 0.0
        %1121 = vmatpush2.msra.mxu0 0.0
        %1122 = vmatprep.subr.mxu0 0.0
        %1123 = vmatpush2.msra.mxu0 0.0
        %1124 = vmatprep.subr.mxu0 0.0
        %1125 = vmatpush2.msra.mxu0 0.0
        %1126 = vmatprep.subr.mxu0 0.0
        %1127 = vmatpush2.msra.mxu0 0.0
        %1128 = vmatprep.mubr.f32.mxu0 0.0
        %1129 = vmatmul.mubr.f32.gmra.mxu0 %v1059
        %v1130 = vpop.f32.mrf.mxu0
        %v1131 = vadd.f32 0.0, %v1130
        %v1132 = vpop.f32.mrf.mxu0
        %1133 = vmatprep.mubr.f32.mxu0 0.0
        %1134 = vmatmul.mubr.f32.gmra.mxu0 %v1062
        %v1135 = vpop.f32.mrf.mxu0
        %v1136 = vadd.f32 0.0, %v1135
        %v1137 = vpop.f32.mrf.mxu0
        %1138 = vdwg.mxu0
        %v1140 = vsel %vm377, %v1131, 0
        %v1143 = vsel %vm377, %v1136, 0
        %1145 = vmatprep.subr.mxu0 0.0
        %1146 = vmatpush1.msra.mxu0 0.0
        %1147 = vmatprep.subr.mxu0 0.0
        %1148 = vmatpush1.msra.mxu0 0.0
        %1149 = vmatprep.subr.mxu0 0.0
        %1150 = vmatpush1.msra.mxu0 0.0
        %1151 = vmatprep.subr.mxu0 0.0
        %1152 = vmatpush1.msra.mxu0 0.0
        %1153 = vmatprep.subr.mxu0 0.0
        %1154 = vmatpush1.msra.mxu0 0.0
        %1155 = vmatprep.subr.mxu0 0.0
        %1156 = vmatpush1.msra.mxu0 0.0
        %1157 = vmatprep.subr.mxu0 0.0
        %1158 = vmatpush1.msra.mxu0 0.0
        %1159 = vmatprep.subr.mxu0 0.0
        %1160 = vmatpush1.msra.mxu0 0.0
        %1161 = vmatprep.subr.mxu0 0.0
        %1162 = vmatpush1.msra.mxu0 0.0
        %1163 = vmatprep.subr.mxu0 0.0
        %1164 = vmatpush1.msra.mxu0 0.0
        %1165 = vmatprep.subr.mxu0 0.0
        %1166 = vmatpush1.msra.mxu0 0.0
        %1167 = vmatprep.subr.mxu0 0.0
        %1168 = vmatpush1.msra.mxu0 0.0
        %1169 = vmatprep.subr.mxu0 0.0
        %1170 = vmatpush1.msra.mxu0 0.0
        %1171 = vmatprep.subr.mxu0 0.0
        %1172 = vmatpush1.msra.mxu0 0.0
        %1173 = vmatprep.subr.mxu0 0.0
        %1174 = vmatpush1.msra.mxu0 0.0
        %1175 = vmatprep.subr.mxu0 0.0
        %1176 = vmatpush1.msra.mxu0 %v280
        %1177 = vmatprep.subr.mxu0 0.0
        %1178 = vmatpush2.msra.mxu0 0.0
        %1179 = vmatprep.subr.mxu0 0.0
        %1180 = vmatpush2.msra.mxu0 0.0
        %1181 = vmatprep.subr.mxu0 0.0
        %1182 = vmatpush2.msra.mxu0 0.0
        %1183 = vmatprep.subr.mxu0 0.0
        %1184 = vmatpush2.msra.mxu0 0.0
        %1185 = vmatprep.subr.mxu0 0.0
        %1186 = vmatpush2.msra.mxu0 0.0
        %1187 = vmatprep.subr.mxu0 0.0
        %1188 = vmatpush2.msra.mxu0 0.0
        %1189 = vmatprep.subr.mxu0 0.0
        %1190 = vmatpush2.msra.mxu0 0.0
        %1191 = vmatprep.subr.mxu0 0.0
        %1192 = vmatpush2.msra.mxu0 0.0
        %1193 = vmatprep.subr.mxu0 0.0
        %1194 = vmatpush2.msra.mxu0 0.0
        %1195 = vmatprep.subr.mxu0 0.0
        %1196 = vmatpush2.msra.mxu0 0.0
        %1197 = vmatprep.subr.mxu0 0.0
        %1198 = vmatpush2.msra.mxu0 0.0
        %1199 = vmatprep.subr.mxu0 0.0
        %1200 = vmatpush2.msra.mxu0 0.0
        %1201 = vmatprep.subr.mxu0 0.0
        %1202 = vmatpush2.msra.mxu0 0.0
        %1203 = vmatprep.subr.mxu0 0.0
        %1204 = vmatpush2.msra.mxu0 0.0
        %1205 = vmatprep.subr.mxu0 0.0
        %1206 = vmatpush2.msra.mxu0 0.0
        %1207 = vmatprep.subr.mxu0 0.0
        %1208 = vmatpush2.msra.mxu0 0.0
        %1209 = vmatprep.mubr.f32.mxu0 0.0
        %1210 = vmatmul.mubr.f32.gmra.mxu0 %v1140
        %v1211 = vpop.f32.mrf.mxu0
        %v1212 = vadd.f32 0.0, %v1211
        %v1213 = vpop.f32.mrf.mxu0
        %1214 = vmatprep.mubr.f32.mxu0 0.0
        %1215 = vmatmul.mubr.f32.gmra.mxu0 %v1143
        %v1216 = vpop.f32.mrf.mxu0
        %v1217 = vadd.f32 0.0, %v1216
        %v1218 = vpop.f32.mrf.mxu0
        %1219 = vdwg.mxu0
        %v1220 = vadd.f32 %v929, %v1212
        %v1221 = vadd.f32 %v934, %v1217
        %1222 = vrot.lane.b32.xlu0 %v363, 104
        %v1223 = vpop.permute.xlu0 %1222
        %1224 = vrot.lane.b32.xlu0 %v368, 104
        %v1225 = vpop.permute.xlu0 %1224
        %1226 = vrot.lane.b32.xlu0 %v363, 72
        %v1227 = vpop.permute.xlu0 %1226
        %1228 = vrot.lane.b32.xlu0 %v368, 72
        %v1229 = vpop.permute.xlu0 %1228
        %v1230 = vsel %vm377, %v1223, 0
        %v1232 = vsel %vm377, %v1225, 0
        %v1234 = vsel %vm377, %v1227, 0
        %v1236 = vsel %vm377, %v1229, 0
        %1238 = vmatprep.subr.mxu0 0.0
        %1239 = vmatpush1.xpose.msra.mxu0 0.0
        %1240 = vmatprep.subr.mxu0 0.0
        %1241 = vmatpush1.xpose.msra.mxu0 0.0
        %1242 = vmatprep.subr.mxu0 0.0
        %1243 = vmatpush1.xpose.msra.mxu0 0.0
        %1244 = vmatprep.subr.mxu0 0.0
        %1245 = vmatpush1.xpose.msra.mxu0 0.0
        %1246 = vmatprep.subr.mxu0 0.0
        %1247 = vmatpush1.xpose.msra.mxu0 0.0
        %1248 = vmatprep.subr.mxu0 0.0
        %1249 = vmatpush1.xpose.msra.mxu0 0.0
        %1250 = vmatprep.subr.mxu0 0.0
        %1251 = vmatpush1.xpose.msra.mxu0 0.0
        %1252 = vmatprep.subr.mxu0 0.0
        %1253 = vmatpush1.xpose.msra.mxu0 0.0
        %1254 = vmatprep.subr.mxu0 0.0
        %1255 = vmatpush1.xpose.msra.mxu0 0.0
        %1256 = vmatprep.subr.mxu0 0.0
        %1257 = vmatpush1.xpose.msra.mxu0 0.0
        %1258 = vmatprep.subr.mxu0 0.0
        %1259 = vmatpush1.xpose.msra.mxu0 0.0
        %1260 = vmatprep.subr.mxu0 0.0
        %1261 = vmatpush1.xpose.msra.mxu0 0.0
        %1262 = vmatprep.subr.mxu0 0.0
        %1263 = vmatpush1.xpose.msra.mxu0 0.0
        %1264 = vmatprep.subr.mxu0 0.0
        %1265 = vmatpush1.xpose.msra.mxu0 0.0
        %1266 = vmatprep.subr.mxu0 0.0
        %1267 = vmatpush1.xpose.msra.mxu0 %v1236
        %1268 = vmatprep.subr.mxu0 0.0
        %1269 = vmatpush1.xpose.msra.mxu0 %v1234
        %1270 = vmatprep.subr.mxu0 0.0
        %1271 = vmatpush2.xpose.msra.mxu0 0.0
        %1272 = vmatprep.subr.mxu0 0.0
        %1273 = vmatpush2.xpose.msra.mxu0 0.0
        %1274 = vmatprep.subr.mxu0 0.0
        %1275 = vmatpush2.xpose.msra.mxu0 0.0
        %1276 = vmatprep.subr.mxu0 0.0
        %1277 = vmatpush2.xpose.msra.mxu0 0.0
        %1278 = vmatprep.subr.mxu0 0.0
        %1279 = vmatpush2.xpose.msra.mxu0 0.0
        %1280 = vmatprep.subr.mxu0 0.0
        %1281 = vmatpush2.xpose.msra.mxu0 0.0
        %1282 = vmatprep.subr.mxu0 0.0
        %1283 = vmatpush2.xpose.msra.mxu0 0.0
        %1284 = vmatprep.subr.mxu0 0.0
        %1285 = vmatpush2.xpose.msra.mxu0 0.0
        %1286 = vmatprep.subr.mxu0 0.0
        %1287 = vmatpush2.xpose.msra.mxu0 0.0
        %1288 = vmatprep.subr.mxu0 0.0
        %1289 = vmatpush2.xpose.msra.mxu0 0.0
        %1290 = vmatprep.subr.mxu0 0.0
        %1291 = vmatpush2.xpose.msra.mxu0 0.0
        %1292 = vmatprep.subr.mxu0 0.0
        %1293 = vmatpush2.xpose.msra.mxu0 0.0
        %1294 = vmatprep.subr.mxu0 0.0
        %1295 = vmatpush2.xpose.msra.mxu0 0.0
        %1296 = vmatprep.subr.mxu0 0.0
        %1297 = vmatpush2.xpose.msra.mxu0 0.0
        %1298 = vmatprep.subr.mxu0 0.0
        %1299 = vmatpush2.xpose.msra.mxu0 0.0
        %1300 = vmatprep.subr.mxu0 0.0
        %1301 = vmatpush2.xpose.msra.mxu0 0.0
        %1302 = vmatprep.mubr.f32.mxu0 0.0
        %1303 = vmatmul.mubr.f32.gmra.mxu0 %v1230
        %v1304 = vpop.f32.mrf.mxu0
        %v1305 = vadd.f32 0.0, %v1304
        %v1306 = vpop.f32.mrf.mxu0
        %1307 = vmatprep.mubr.f32.mxu0 0.0
        %1308 = vmatmul.mubr.f32.gmra.mxu0 %v1232
        %v1309 = vpop.f32.mrf.mxu0
        %v1310 = vadd.f32 0.0, %v1309
        %v1311 = vpop.f32.mrf.mxu0
        %1312 = vdwg.mxu0
        %v1313 = vmul.f32 %v1305, 0.35355338
        %v1314 = vmul.f32 %v1310, 0.35355338
        %v1315 = vsel %vm463, %v1313, -inf
        %1316 = vmax.xlane.f32.xlu0 %v1315
        %v1317 = vpop.xlane.xlu0 %1316
        %v1318 = vsel %vm463, %v1314, -inf
        %1319 = vmax.xlane.f32.xlu0 %v1318
        %v1320 = vpop.xlane.xlu0 %1319
        %v1321 = vsub.f32 %v1313, %v1317
        %v1322 = vsub.f32 %v1314, %v1320
        %v1323 = vmul.f32 %v1321, 1.442695
        %v1324 = vpow.pop %v1323
        %v1325 = vmul.f32 %v1322, 1.442695
        %v1326 = vpow.pop %v1325
        %v1327 = vsel %vm463, %v1324, 0.0
        %1328 = vadd.xlane.f32.xlu0 %v1327
        %v1329 = vpop.xlane.xlu0 %1328
        %v1330 = vsel %vm463, %v1326, 0.0
        %1331 = vadd.xlane.f32.xlu0 %v1330
        %v1332 = vpop.xlane.xlu0 %1331
        %v1333 = vrcp.pop %v1329
        %v1334 = vmul.f32 %v1324, %v1333
        %v1335 = vrcp.pop %v1332
        %v1336 = vmul.f32 %v1326, %v1335
        %1337 = vrot.lane.b32.xlu0 %v363, 40
        %v1338 = vpop.permute.xlu0 %1337
        %1339 = vrot.lane.b32.xlu0 %v368, 40
        %v1340 = vpop.permute.xlu0 %1339
        %v1344 = vsel %vm463, %v1334, 0
        %v1347 = vsel %vm463, %v1336, 0
        %1349 = vmatprep.subr.mxu0 0.0
        %1350 = vmatpush1.msra.mxu0 0.0
        %1351 = vmatprep.subr.mxu0 0.0
        %1352 = vmatpush1.msra.mxu0 0.0
        %1353 = vmatprep.subr.mxu0 0.0
        %1354 = vmatpush1.msra.mxu0 0.0
        %1355 = vmatprep.subr.mxu0 0.0
        %1356 = vmatpush1.msra.mxu0 0.0
        %1357 = vmatprep.subr.mxu0 0.0
        %1358 = vmatpush1.msra.mxu0 0.0
        %1359 = vmatprep.subr.mxu0 0.0
        %1360 = vmatpush1.msra.mxu0 0.0
        %1361 = vmatprep.subr.mxu0 0.0
        %1362 = vmatpush1.msra.mxu0 0.0
        %1363 = vmatprep.subr.mxu0 0.0
        %1364 = vmatpush1.msra.mxu0 0.0
        %1365 = vmatprep.subr.mxu0 0.0
        %1366 = vmatpush1.msra.mxu0 0.0
        %1367 = vmatprep.subr.mxu0 0.0
        %1368 = vmatpush1.msra.mxu0 0.0
        %1369 = vmatprep.subr.mxu0 0.0
        %1370 = vmatpush1.msra.mxu0 0.0
        %1371 = vmatprep.subr.mxu0 0.0
        %1372 = vmatpush1.msra.mxu0 0.0
        %1373 = vmatprep.subr.mxu0 0.0
        %1374 = vmatpush1.msra.mxu0 0.0
        %1375 = vmatprep.subr.mxu0 0.0
        %1376 = vmatpush1.msra.mxu0 0.0
        %1377 = vmatprep.subr.mxu0 0.0
        %1378 = vmatpush1.msra.mxu0 %v1340
        %1379 = vmatprep.subr.mxu0 0.0
        %1380 = vmatpush1.msra.mxu0 %v1338
        %1381 = vmatprep.subr.mxu0 0.0
        %1382 = vmatpush2.msra.mxu0 0.0
        %1383 = vmatprep.subr.mxu0 0.0
        %1384 = vmatpush2.msra.mxu0 0.0
        %1385 = vmatprep.subr.mxu0 0.0
        %1386 = vmatpush2.msra.mxu0 0.0
        %1387 = vmatprep.subr.mxu0 0.0
        %1388 = vmatpush2.msra.mxu0 0.0
        %1389 = vmatprep.subr.mxu0 0.0
        %1390 = vmatpush2.msra.mxu0 0.0
        %1391 = vmatprep.subr.mxu0 0.0
        %1392 = vmatpush2.msra.mxu0 0.0
        %1393 = vmatprep.subr.mxu0 0.0
        %1394 = vmatpush2.msra.mxu0 0.0
        %1395 = vmatprep.subr.mxu0 0.0
        %1396 = vmatpush2.msra.mxu0 0.0
        %1397 = vmatprep.subr.mxu0 0.0
        %1398 = vmatpush2.msra.mxu0 0.0
        %1399 = vmatprep.subr.mxu0 0.0
        %1400 = vmatpush2.msra.mxu0 0.0
        %1401 = vmatprep.subr.mxu0 0.0
        %1402 = vmatpush2.msra.mxu0 0.0
        %1403 = vmatprep.subr.mxu0 0.0
        %1404 = vmatpush2.msra.mxu0 0.0
        %1405 = vmatprep.subr.mxu0 0.0
        %1406 = vmatpush2.msra.mxu0 0.0
        %1407 = vmatprep.subr.mxu0 0.0
        %1408 = vmatpush2.msra.mxu0 0.0
        %1409 = vmatprep.subr.mxu0 0.0
        %1410 = vmatpush2.msra.mxu0 0.0
        %1411 = vmatprep.subr.mxu0 0.0
        %1412 = vmatpush2.msra.mxu0 0.0
        %1413 = vmatprep.mubr.f32.mxu0 0.0
        %1414 = vmatmul.mubr.f32.gmra.mxu0 %v1344
        %v1415 = vpop.f32.mrf.mxu0
        %v1416 = vadd.f32 0.0, %v1415
        %v1417 = vpop.f32.mrf.mxu0
        %1418 = vmatprep.mubr.f32.mxu0 0.0
        %1419 = vmatmul.mubr.f32.gmra.mxu0 %v1347
        %v1420 = vpop.f32.mrf.mxu0
        %v1421 = vadd.f32 0.0, %v1420
        %v1422 = vpop.f32.mrf.mxu0
        %1423 = vdwg.mxu0
        %v1425 = vsel %vm377, %v1416, 0
        %v1428 = vsel %vm377, %v1421, 0
        %1430 = vmatprep.subr.mxu0 0.0
        %1431 = vmatpush1.msra.mxu0 0.0
        %1432 = vmatprep.subr.mxu0 0.0
        %1433 = vmatpush1.msra.mxu0 0.0
        %1434 = vmatprep.subr.mxu0 0.0
        %1435 = vmatpush1.msra.mxu0 0.0
        %1436 = vmatprep.subr.mxu0 0.0
        %1437 = vmatpush1.msra.mxu0 0.0
        %1438 = vmatprep.subr.mxu0 0.0
        %1439 = vmatpush1.msra.mxu0 0.0
        %1440 = vmatprep.subr.mxu0 0.0
        %1441 = vmatpush1.msra.mxu0 0.0
        %1442 = vmatprep.subr.mxu0 0.0
        %1443 = vmatpush1.msra.mxu0 0.0
        %1444 = vmatprep.subr.mxu0 0.0
        %1445 = vmatpush1.msra.mxu0 0.0
        %1446 = vmatprep.subr.mxu0 0.0
        %1447 = vmatpush1.msra.mxu0 0.0
        %1448 = vmatprep.subr.mxu0 0.0
        %1449 = vmatpush1.msra.mxu0 0.0
        %1450 = vmatprep.subr.mxu0 0.0
        %1451 = vmatpush1.msra.mxu0 0.0
        %1452 = vmatprep.subr.mxu0 0.0
        %1453 = vmatpush1.msra.mxu0 0.0
        %1454 = vmatprep.subr.mxu0 0.0
        %1455 = vmatpush1.msra.mxu0 0.0
        %1456 = vmatprep.subr.mxu0 0.0
        %1457 = vmatpush1.msra.mxu0 0.0
        %1458 = vmatprep.subr.mxu0 0.0
        %1459 = vmatpush1.msra.mxu0 0.0
        %1460 = vmatprep.subr.mxu0 0.0
        %1461 = vmatpush1.msra.mxu0 %v281
        %1462 = vmatprep.subr.mxu0 0.0
        %1463 = vmatpush2.msra.mxu0 0.0
        %1464 = vmatprep.subr.mxu0 0.0
        %1465 = vmatpush2.msra.mxu0 0.0
        %1466 = vmatprep.subr.mxu0 0.0
        %1467 = vmatpush2.msra.mxu0 0.0
        %1468 = vmatprep.subr.mxu0 0.0
        %1469 = vmatpush2.msra.mxu0 0.0
        %1470 = vmatprep.subr.mxu0 0.0
        %1471 = vmatpush2.msra.mxu0 0.0
        %1472 = vmatprep.subr.mxu0 0.0
        %1473 = vmatpush2.msra.mxu0 0.0
        %1474 = vmatprep.subr.mxu0 0.0
        %1475 = vmatpush2.msra.mxu0 0.0
        %1476 = vmatprep.subr.mxu0 0.0
        %1477 = vmatpush2.msra.mxu0 0.0
        %1478 = vmatprep.subr.mxu0 0.0
        %1479 = vmatpush2.msra.mxu0 0.0
        %1480 = vmatprep.subr.mxu0 0.0
        %1481 = vmatpush2.msra.mxu0 0.0
        %1482 = vmatprep.subr.mxu0 0.0
        %1483 = vmatpush2.msra.mxu0 0.0
        %1484 = vmatprep.subr.mxu0 0.0
        %1485 = vmatpush2.msra.mxu0 0.0
        %1486 = vmatprep.subr.mxu0 0.0
        %1487 = vmatpush2.msra.mxu0 0.0
        %1488 = vmatprep.subr.mxu0 0.0
        %1489 = vmatpush2.msra.mxu0 0.0
        %1490 = vmatprep.subr.mxu0 0.0
        %1491 = vmatpush2.msra.mxu0 0.0
        %1492 = vmatprep.subr.mxu0 0.0
        %1493 = vmatpush2.msra.mxu0 0.0
        %1494 = vmatprep.mubr.f32.mxu0 0.0
        %1495 = vmatmul.mubr.f32.gmra.mxu0 %v1425
        %v1496 = vpop.f32.mrf.mxu0
        %v1497 = vadd.f32 0.0, %v1496
        %v1498 = vpop.f32.mrf.mxu0
        %1499 = vmatprep.mubr.f32.mxu0 0.0
        %1500 = vmatmul.mubr.f32.gmra.mxu0 %v1428
        %v1501 = vpop.f32.mrf.mxu0
        %v1502 = vadd.f32 0.0, %v1501
        %v1503 = vpop.f32.mrf.mxu0
        %1504 = vdwg.mxu0
        %v1505 = vadd.f32 %v1220, %v1497
        %v1506 = vadd.f32 %v1221, %v1502
        %v1507 = vld [vmem:[%s4] sm:$0x1]
        %v1509 = vlaneseq
        %v1510 = vshrl.u32 %v1509, 7
        %v1511 = vsub.s32 0, %v1510
        %v1512 = vrot.slane %v1507, %v1511
        %v1514 = vadd.f32 %v1505, %v1512
        %v1515 = vadd.f32 %v1506, %v1512
        %1516 = vst.msk [vmem:[%s271] sm:$0xff] %vm289, %v1514
        %1517 = vst.msk [vmem:[%s271 + $0x8] sm:$0xff] %vm289, %v1515
        %s1518 = sand.u32 %s141, 1
        %s1519 = scalar_lea.sflag [#allocation4], %s1518
        %s1520 = sand.u32 %s141, 1
        %s1521 = smul.addr %s1520, 16
        %s1522 = scalar_lea.vmem [#allocation8], %s1521
        // Predicated region
        $region53: #{tpu_custom_call.1} parent=39 // pred_check
          %p1523 = pneg %p151
        $region54: #{tpu_custom_call.1} parent=39 // pred_check_branch
          %1525 = sbr.rel (%p1523) target = $region56
        $region55: #{tpu_custom_call.1} parent=39 // pred_region
          %s1527 = ssub.s32 256, 256
          %1528 = vsyncadd %s1519, %s1527
          %s1529 = smul.addr %s23, 2
          %s1530 = smul.addr %s1529, 128
          %s1531 = scalar_lea.hbm %s5, %s1530
          %s1532 = sshll.u32 %s1522, 4
          %s1533 = int_to_ptr.vmem [resolvable:$true] %s1532
          %1538 = dma.vmem_to_hbm [thread:$0]  %s1533, 256, %s1531, %s1519, 128, 128, 8
        $region56: #{tpu_custom_call.1} parent=39 // pred_fallthru
          _
      $region40: #{tpu_custom_call.1} parent=5 // pred_fallthru
        _
      %p1539 = scmp.le.s32.totalorder 2, %s18
      // Predicated region
      $region57: #{tpu_custom_call.1} parent=5 // pred_check
        %p1540 = pneg %p1539
      $region58: #{tpu_custom_call.1} parent=5 // pred_check_branch
        %1542 = sbr.rel (%p1540) target = $region60
      $region59: #{tpu_custom_call.1} parent=5 // pred_region
        %s1543 = ssub.s32 %s18, 2
        // Predicated region
        $region61: #{tpu_custom_call.1} parent=59 // pred_check
          %p1544 = pneg %p157
        $region62: #{tpu_custom_call.1} parent=59 // pred_check_branch
          %1546 = sbr.rel (%p1544) target = $region64
        $region63: #{tpu_custom_call.1} parent=59 // pred_region
          %s1547 = sand.u32 %s142, 1
          %s1548 = scalar_lea.sflag [#allocation4], %s1547
          %s1549 = sand.u32 %s142, 1
          %s1550 = smul.addr %s1549, 16
          %s1551 = scalar_lea.vmem [#allocation8], %s1550
          %1552 = dma.done %s1548, 256
        $region64: #{tpu_custom_call.1} parent=59 // pred_fallthru
          _
      $region60: #{tpu_custom_call.1} parent=5 // pred_fallthru
        _
    $region6: #{tpu_custom_call.1} parent=1 // loop_footer
      %s22 = sadd.s32 1, %s18
    $region7: #{tpu_custom_call.1} parent=1 // loop_footer_branch
      %17 = sbr.rel target = $region3
    $region8: #{tpu_custom_call.1} parent=1 // loop_exit
      _
    %1553 = vsyncpa [#allocation3], 1
    %s1554 = scalar_lea.sflag [#allocation3], 1
    %1555 = vsyncpa %s1554, 1
    %1556 = vsyncpa [#allocation6], 1
    %1557 = vsyncpa [#allocation4], 1
    %s1558 = scalar_lea.sflag [#allocation4], 1
    %1559 = vsyncpa %s1558, 1

</llo_original>
